<compile_context>
chip_gen: v7x
topology: tpu7x:2x2x1
jax: 0.10.0
libtpu: 0.0.40
codegen_flags: <defaults>
</compile_context>

<pallas_src>
import jax
import jax.numpy as jnp
from jax import lax
from jax.experimental import pallas as pl
from jax.experimental.pallas import tpu as pltpu

KSIZE = 5
PAD = 2  # kernel_size=5 -> padding=2 ("same" conv)


def _make_kernel(C, W, HWp):
    n_w = 3 * KSIZE * KSIZE

    def kernel(w_ref, m_ref, x_ref, o_ref):
        # w_ref: SMEM (75,)  conv weight flattened OIHW (O=1) -> index [c, j, i]
        # m_ref: VMEM (10, HWp) 0/1 masks; rows 0..4 row masks (sy=j-2),
        #        rows 5..9 column masks (sx=i-2)
        # x_ref: VMEM (NB, C, HWp)
        # o_ref: VMEM (NB, HWp)

        # Hoist all scalar weights out of the tap loops (one sld + splat each).
        w = [w_ref[k] for k in range(n_w)]

        # Hoist boundary masks (centre taps need no mask).
        rmask = [None] * KSIZE
        cmask = [None] * KSIZE
        for j in range(KSIZE):
            if j != PAD:
                rmask[j] = m_ref[j].reshape(1, HWp)
                cmask[j] = m_ref[KSIZE + j].reshape(1, HWp)

        # Single pass over channels: sum / max / min together (1x load traffic).
        x0 = x_ref[:, 0, :].astype(jnp.float32)
        csum, cmax, cmin = x0, x0, x0
        for c in range(1, C):
            xc = x_ref[:, c, :].astype(jnp.float32)
            csum = csum + xc
            cmax = jnp.maximum(cmax, xc)
            cmin = jnp.minimum(cmin, xc)
        feats = (csum * (1.0 / C), cmax, cmin)  # [avg, max, min], each (NB, HWp)

        # Fused tap accumulation: build each row-shifted (XLU roll) + row-masked
        # map once, FMA it into the 5 column-shift partials, let it die.
        partials = [None] * KSIZE
        for c in range(3):
            for j in range(KSIZE):
                sy = j - PAD
                if sy == 0:
                    r = feats[c]
                else:
                    r = pltpu.roll(feats[c], (-sy * W) % HWp, axis=1) * rmask[j]
                base = c * KSIZE * KSIZE + j * KSIZE
                for i in range(KSIZE):
                    t = r * w[base + i]
                    partials[i] = t if partials[i] is None else partials[i] + t

        # Column roll (roll is linear, so it commutes with the weighted sum),
        # column mask, and immediate fold into a single running accumulator.
        acc = None
        for i in range(KSIZE):
            sx = i - PAD
            part = partials[i]
            if sx != 0:
                part = pltpu.roll(part, (-sx) % HWp, axis=1) * cmask[i]
            acc = part if acc is None else acc + part

        o_ref[...] = jax.nn.sigmoid(acc).astype(o_ref.dtype)

    return kernel


def _pick_batch_block(N, C, HWp, itemsize):
    # (NB, HWp) output block: second-to-last dim must be a multiple of 8 or the
    # full batch dimension.
    cands = [nb for nb in range(N, 0, -1)
             if N % nb == 0 and (nb % 8 == 0 or nb == N)]

    def step_bytes(nb):
        return (2 * nb * C * HWp * itemsize      # x block, double-buffered
                + 2 * nb * HWp * itemsize        # out block, double-buffered
                + 2 * 2 * KSIZE * HWp * 4        # masks
                + 28 * nb * HWp * 4)             # live f32 intermediates headroom

    budget = 20 << 20  # keep well under v7x's 32 MiB scoped / 64 MiB physical VMEM
    fits = [nb for nb in cands if step_bytes(nb) <= budget] or [cands[-1]]
    # Prefer >= 2 grid steps (feeds both v7x TensorCores) but keep steps few
    # (per-step overhead on single-TC v5e/v6e).
    multi = [nb for nb in fits if N // nb >= 2]
    nb = multi[0] if multi else fits[0]
    return nb, step_bytes(nb)


def _make_masks(H, W, HWp):
    p = jnp.arange(HWp, dtype=jnp.int32)
    y = p // W
    x = p - y * W
    rows = [((y + (j - PAD) >= 0) & (y + (j - PAD) < H)) for j in range(KSIZE)]
    cols = [((x + (i - PAD) >= 0) & (x + (i - PAD) < W)) for i in range(KSIZE)]
    return jnp.stack(rows + cols, axis=0).astype(jnp.float32)  # (10, HWp)


def spatial_attention(x, weight):
    """x: (N, C, H, W); weight: (1, 3, 5, 5) -> sigmoid(conv5x5([mean,max,min](x)))."""
    N, C, H, W = x.shape
    HW = H * W
    HWp = ((HW + 127) // 128) * 128  # lane-dense minor dim
    NB, step_bytes = _pick_batch_block(N, C, HWp, x.dtype.itemsize)

    xr = x.reshape(N, C, HW)  # free reshape; no wrapper transpose
    if HWp != HW:
        xr = jnp.pad(xr, ((0, 0), (0, 0), (0, HWp - HW)))
    w_flat = weight.reshape(-1).astype(jnp.float32)  # (75,)
    masks = _make_masks(H, W, HWp)

    vmem_limit = int(min(max(step_bytes + (2 << 20), 16 << 20), 48 << 20))

    out = pl.pallas_call(
        _make_kernel(C, W, HWp),
        out_shape=jax.ShapeDtypeStruct((N, HWp), x.dtype),
        grid_spec=pltpu.PrefetchScalarGridSpec(
            num_scalar_prefetch=0,
            grid=(N // NB,),
            in_specs=[
                pl.BlockSpec(memory_space=pltpu.MemorySpace.SMEM),   # conv weight
                pl.BlockSpec((2 * KSIZE, HWp), lambda n: (0, 0)),    # geometry masks
                pl.BlockSpec((NB, C, HWp), lambda n: (n, 0, 0)),     # x, NB images/step
            ],
            out_specs=pl.BlockSpec((NB, HWp), lambda n: (n, 0)),
        ),
        compiler_params=pltpu.CompilerParams(
            dimension_semantics=("parallel",),
            vmem_limit_bytes=vmem_limit,
        ),
    )(w_flat, masks, xr)

    if HWp != HW:
        out = out[:, :HW]
    return out.reshape(N, 1, H, W)


def reference(x, weight):
    avg_out = jnp.mean(x, axis=1, keepdims=True)
    max_out = jnp.max(x, axis=1, keepdims=True)
    min_out = jnp.min(x, axis=1, keepdims=True)
    feat = jnp.concatenate([avg_out, max_out, min_out], axis=1)
    out = lax.conv_general_dilated(
        feat, weight, window_strides=(1, 1),
        padding=((PAD, PAD), (PAD, PAD)),
        dimension_numbers=("NCHW", "OIHW", "NCHW"))
    return jax.nn.sigmoid(out)


if __name__ == "__main__":
    key = jax.random.PRNGKey(0)
    kx, kw, kx2 = jax.random.split(key, 3)

    # Deterministic Conv2d(3, 1, 5, bias=False) weight, PyTorch-style uniform init.
    fan_in = 3 * KSIZE * KSIZE
    bound = 1.0 / (fan_in ** 0.5)
    weight = jax.random.uniform(kw, (1, 3, KSIZE, KSIZE), jnp.float32, -bound, bound)

    # Shape matching MSDMNet defaults (batch_size=16, ms_band_num=4).
    N, C, H, W = 16, 4, 16, 16
    x = jax.random.normal(kx, (N, C, H, W), dtype=jnp.float32)
    out = spatial_attention(x, weight)
    jax.block_until_ready(out)
    ref = reference(x, weight)
    assert out.shape == (N, 1, H, W)
    assert jnp.allclose(out, ref, atol=1e-5, rtol=1e-5), float(jnp.max(jnp.abs(out - ref)))

    # Non-128-multiple spatial size exercises the lane-padding path.
    N2, H2, W2 = 3, 10, 10
    x2 = jax.random.normal(kx2, (N2, C, H2, W2), dtype=jnp.float32)
    out2 = spatial_attention(x2, weight)
    jax.block_until_ready(out2)
    ref2 = reference(x2, weight)
    assert out2.shape == (N2, 1, H2, W2)
    assert jnp.allclose(out2, ref2, atol=1e-5, rtol=1e-5), float(jnp.max(jnp.abs(out2 - ref2)))

    print("KERNEL_OK")
</pallas_src>

<mosaic_0001>
module attributes {stable_mosaic.version = 11 : i64} {
  func.func @kernel(%arg0: i32, %arg1: memref<75xf32, #tpu.memory_space<smem>>, %arg2: memref<10x256xf32, #tpu.memory_space<vmem>>, %arg3: memref<8x4x256xf32, #tpu.memory_space<vmem>>, %arg4: memref<8x256xf32, #tpu.memory_space<vmem>>) attributes {dimension_semantics = [#tpu.dimension_semantics<parallel>], iteration_bounds = array<i64: 2>, scalar_prefetch = 0 : i64, scratch_operands = 0 : i64, tpu.core_type = #tpu.core_type<tc>, window_params = [{transform_indices = @transform_0, window_bounds = array<i64: 75>}, {pipeline_mode = #tpu.pipeline_mode<synchronous>, transform_indices = @transform_1, window_bounds = array<i64: 10, 256>}, {transform_indices = @transform_2, window_bounds = array<i64: 8, 4, 256>}, {transform_indices = @transform_3, window_bounds = array<i64: 8, 256>}]} {
    %c0 = arith.constant 0 : index
    %0 = memref.load %arg1[%c0] : memref<75xf32, #tpu.memory_space<smem>>
    %c1 = arith.constant 1 : index
    %1 = memref.load %arg1[%c1] : memref<75xf32, #tpu.memory_space<smem>>
    %c2 = arith.constant 2 : index
    %2 = memref.load %arg1[%c2] : memref<75xf32, #tpu.memory_space<smem>>
    %c3 = arith.constant 3 : index
    %3 = memref.load %arg1[%c3] : memref<75xf32, #tpu.memory_space<smem>>
    %c4 = arith.constant 4 : index
    %4 = memref.load %arg1[%c4] : memref<75xf32, #tpu.memory_space<smem>>
    %c5 = arith.constant 5 : index
    %5 = memref.load %arg1[%c5] : memref<75xf32, #tpu.memory_space<smem>>
    %c6 = arith.constant 6 : index
    %6 = memref.load %arg1[%c6] : memref<75xf32, #tpu.memory_space<smem>>
    %c7 = arith.constant 7 : index
    %7 = memref.load %arg1[%c7] : memref<75xf32, #tpu.memory_space<smem>>
    %c8 = arith.constant 8 : index
    %8 = memref.load %arg1[%c8] : memref<75xf32, #tpu.memory_space<smem>>
    %c9 = arith.constant 9 : index
    %9 = memref.load %arg1[%c9] : memref<75xf32, #tpu.memory_space<smem>>
    %c10 = arith.constant 10 : index
    %10 = memref.load %arg1[%c10] : memref<75xf32, #tpu.memory_space<smem>>
    %c11 = arith.constant 11 : index
    %11 = memref.load %arg1[%c11] : memref<75xf32, #tpu.memory_space<smem>>
    %c12 = arith.constant 12 : index
    %12 = memref.load %arg1[%c12] : memref<75xf32, #tpu.memory_space<smem>>
    %c13 = arith.constant 13 : index
    %13 = memref.load %arg1[%c13] : memref<75xf32, #tpu.memory_space<smem>>
    %c14 = arith.constant 14 : index
    %14 = memref.load %arg1[%c14] : memref<75xf32, #tpu.memory_space<smem>>
    %c15 = arith.constant 15 : index
    %15 = memref.load %arg1[%c15] : memref<75xf32, #tpu.memory_space<smem>>
    %c16 = arith.constant 16 : index
    %16 = memref.load %arg1[%c16] : memref<75xf32, #tpu.memory_space<smem>>
    %c17 = arith.constant 17 : index
    %17 = memref.load %arg1[%c17] : memref<75xf32, #tpu.memory_space<smem>>
    %c18 = arith.constant 18 : index
    %18 = memref.load %arg1[%c18] : memref<75xf32, #tpu.memory_space<smem>>
    %c19 = arith.constant 19 : index
    %19 = memref.load %arg1[%c19] : memref<75xf32, #tpu.memory_space<smem>>
    %c20 = arith.constant 20 : index
    %20 = memref.load %arg1[%c20] : memref<75xf32, #tpu.memory_space<smem>>
    %c21 = arith.constant 21 : index
    %21 = memref.load %arg1[%c21] : memref<75xf32, #tpu.memory_space<smem>>
    %c22 = arith.constant 22 : index
    %22 = memref.load %arg1[%c22] : memref<75xf32, #tpu.memory_space<smem>>
    %c23 = arith.constant 23 : index
    %23 = memref.load %arg1[%c23] : memref<75xf32, #tpu.memory_space<smem>>
    %c24 = arith.constant 24 : index
    %24 = memref.load %arg1[%c24] : memref<75xf32, #tpu.memory_space<smem>>
    %c25 = arith.constant 25 : index
    %25 = memref.load %arg1[%c25] : memref<75xf32, #tpu.memory_space<smem>>
    %c26 = arith.constant 26 : index
    %26 = memref.load %arg1[%c26] : memref<75xf32, #tpu.memory_space<smem>>
    %c27 = arith.constant 27 : index
    %27 = memref.load %arg1[%c27] : memref<75xf32, #tpu.memory_space<smem>>
    %c28 = arith.constant 28 : index
    %28 = memref.load %arg1[%c28] : memref<75xf32, #tpu.memory_space<smem>>
    %c29 = arith.constant 29 : index
    %29 = memref.load %arg1[%c29] : memref<75xf32, #tpu.memory_space<smem>>
    %c30 = arith.constant 30 : index
    %30 = memref.load %arg1[%c30] : memref<75xf32, #tpu.memory_space<smem>>
    %c31 = arith.constant 31 : index
    %31 = memref.load %arg1[%c31] : memref<75xf32, #tpu.memory_space<smem>>
    %c32 = arith.constant 32 : index
    %32 = memref.load %arg1[%c32] : memref<75xf32, #tpu.memory_space<smem>>
    %c33 = arith.constant 33 : index
    %33 = memref.load %arg1[%c33] : memref<75xf32, #tpu.memory_space<smem>>
    %c34 = arith.constant 34 : index
    %34 = memref.load %arg1[%c34] : memref<75xf32, #tpu.memory_space<smem>>
    %c35 = arith.constant 35 : index
    %35 = memref.load %arg1[%c35] : memref<75xf32, #tpu.memory_space<smem>>
    %c36 = arith.constant 36 : index
    %36 = memref.load %arg1[%c36] : memref<75xf32, #tpu.memory_space<smem>>
    %c37 = arith.constant 37 : index
    %37 = memref.load %arg1[%c37] : memref<75xf32, #tpu.memory_space<smem>>
    %c38 = arith.constant 38 : index
    %38 = memref.load %arg1[%c38] : memref<75xf32, #tpu.memory_space<smem>>
    %c39 = arith.constant 39 : index
    %39 = memref.load %arg1[%c39] : memref<75xf32, #tpu.memory_space<smem>>
    %c40 = arith.constant 40 : index
    %40 = memref.load %arg1[%c40] : memref<75xf32, #tpu.memory_space<smem>>
    %c41 = arith.constant 41 : index
    %41 = memref.load %arg1[%c41] : memref<75xf32, #tpu.memory_space<smem>>
    %c42 = arith.constant 42 : index
    %42 = memref.load %arg1[%c42] : memref<75xf32, #tpu.memory_space<smem>>
    %c43 = arith.constant 43 : index
    %43 = memref.load %arg1[%c43] : memref<75xf32, #tpu.memory_space<smem>>
    %c44 = arith.constant 44 : index
    %44 = memref.load %arg1[%c44] : memref<75xf32, #tpu.memory_space<smem>>
    %c45 = arith.constant 45 : index
    %45 = memref.load %arg1[%c45] : memref<75xf32, #tpu.memory_space<smem>>
    %c46 = arith.constant 46 : index
    %46 = memref.load %arg1[%c46] : memref<75xf32, #tpu.memory_space<smem>>
    %c47 = arith.constant 47 : index
    %47 = memref.load %arg1[%c47] : memref<75xf32, #tpu.memory_space<smem>>
    %c48 = arith.constant 48 : index
    %48 = memref.load %arg1[%c48] : memref<75xf32, #tpu.memory_space<smem>>
    %c49 = arith.constant 49 : index
    %49 = memref.load %arg1[%c49] : memref<75xf32, #tpu.memory_space<smem>>
    %c50 = arith.constant 50 : index
    %50 = memref.load %arg1[%c50] : memref<75xf32, #tpu.memory_space<smem>>
    %c51 = arith.constant 51 : index
    %51 = memref.load %arg1[%c51] : memref<75xf32, #tpu.memory_space<smem>>
    %c52 = arith.constant 52 : index
    %52 = memref.load %arg1[%c52] : memref<75xf32, #tpu.memory_space<smem>>
    %c53 = arith.constant 53 : index
    %53 = memref.load %arg1[%c53] : memref<75xf32, #tpu.memory_space<smem>>
    %c54 = arith.constant 54 : index
    %54 = memref.load %arg1[%c54] : memref<75xf32, #tpu.memory_space<smem>>
    %c55 = arith.constant 55 : index
    %55 = memref.load %arg1[%c55] : memref<75xf32, #tpu.memory_space<smem>>
    %c56 = arith.constant 56 : index
    %56 = memref.load %arg1[%c56] : memref<75xf32, #tpu.memory_space<smem>>
    %c57 = arith.constant 57 : index
    %57 = memref.load %arg1[%c57] : memref<75xf32, #tpu.memory_space<smem>>
    %c58 = arith.constant 58 : index
    %58 = memref.load %arg1[%c58] : memref<75xf32, #tpu.memory_space<smem>>
    %c59 = arith.constant 59 : index
    %59 = memref.load %arg1[%c59] : memref<75xf32, #tpu.memory_space<smem>>
    %c60 = arith.constant 60 : index
    %60 = memref.load %arg1[%c60] : memref<75xf32, #tpu.memory_space<smem>>
    %c61 = arith.constant 61 : index
    %61 = memref.load %arg1[%c61] : memref<75xf32, #tpu.memory_space<smem>>
    %c62 = arith.constant 62 : index
    %62 = memref.load %arg1[%c62] : memref<75xf32, #tpu.memory_space<smem>>
    %c63 = arith.constant 63 : index
    %63 = memref.load %arg1[%c63] : memref<75xf32, #tpu.memory_space<smem>>
    %c64 = arith.constant 64 : index
    %64 = memref.load %arg1[%c64] : memref<75xf32, #tpu.memory_space<smem>>
    %c65 = arith.constant 65 : index
    %65 = memref.load %arg1[%c65] : memref<75xf32, #tpu.memory_space<smem>>
    %c66 = arith.constant 66 : index
    %66 = memref.load %arg1[%c66] : memref<75xf32, #tpu.memory_space<smem>>
    %c67 = arith.constant 67 : index
    %67 = memref.load %arg1[%c67] : memref<75xf32, #tpu.memory_space<smem>>
    %c68 = arith.constant 68 : index
    %68 = memref.load %arg1[%c68] : memref<75xf32, #tpu.memory_space<smem>>
    %c69 = arith.constant 69 : index
    %69 = memref.load %arg1[%c69] : memref<75xf32, #tpu.memory_space<smem>>
    %c70 = arith.constant 70 : index
    %70 = memref.load %arg1[%c70] : memref<75xf32, #tpu.memory_space<smem>>
    %c71 = arith.constant 71 : index
    %71 = memref.load %arg1[%c71] : memref<75xf32, #tpu.memory_space<smem>>
    %c72 = arith.constant 72 : index
    %72 = memref.load %arg1[%c72] : memref<75xf32, #tpu.memory_space<smem>>
    %c73 = arith.constant 73 : index
    %73 = memref.load %arg1[%c73] : memref<75xf32, #tpu.memory_space<smem>>
    %c74 = arith.constant 74 : index
    %74 = memref.load %arg1[%c74] : memref<75xf32, #tpu.memory_space<smem>>
    %c0_0 = arith.constant 0 : index
    %c0_1 = arith.constant 0 : index
    %75 = vector.load %arg2[%c0_0, %c0_1] : memref<10x256xf32, #tpu.memory_space<vmem>>, vector<1x256xf32>
    %76 = vector.shape_cast %75 : vector<1x256xf32> to vector<256xf32>
    %77 = vector.shape_cast %76 : vector<256xf32> to vector<1x256xf32>
    %c5_2 = arith.constant 5 : index
    %c0_3 = arith.constant 0 : index
    %78 = vector.load %arg2[%c5_2, %c0_3] : memref<10x256xf32, #tpu.memory_space<vmem>>, vector<1x256xf32>
    %79 = vector.shape_cast %78 : vector<1x256xf32> to vector<256xf32>
    %80 = vector.shape_cast %79 : vector<256xf32> to vector<1x256xf32>
    %c1_4 = arith.constant 1 : index
    %c0_5 = arith.constant 0 : index
    %81 = vector.load %arg2[%c1_4, %c0_5] : memref<10x256xf32, #tpu.memory_space<vmem>>, vector<1x256xf32>
    %82 = vector.shape_cast %81 : vector<1x256xf32> to vector<256xf32>
    %83 = vector.shape_cast %82 : vector<256xf32> to vector<1x256xf32>
    %c6_6 = arith.constant 6 : index
    %c0_7 = arith.constant 0 : index
    %84 = vector.load %arg2[%c6_6, %c0_7] : memref<10x256xf32, #tpu.memory_space<vmem>>, vector<1x256xf32>
    %85 = vector.shape_cast %84 : vector<1x256xf32> to vector<256xf32>
    %86 = vector.shape_cast %85 : vector<256xf32> to vector<1x256xf32>
    %c3_8 = arith.constant 3 : index
    %c0_9 = arith.constant 0 : index
    %87 = vector.load %arg2[%c3_8, %c0_9] : memref<10x256xf32, #tpu.memory_space<vmem>>, vector<1x256xf32>
    %88 = vector.shape_cast %87 : vector<1x256xf32> to vector<256xf32>
    %89 = vector.shape_cast %88 : vector<256xf32> to vector<1x256xf32>
    %c8_10 = arith.constant 8 : index
    %c0_11 = arith.constant 0 : index
    %90 = vector.load %arg2[%c8_10, %c0_11] : memref<10x256xf32, #tpu.memory_space<vmem>>, vector<1x256xf32>
    %91 = vector.shape_cast %90 : vector<1x256xf32> to vector<256xf32>
    %92 = vector.shape_cast %91 : vector<256xf32> to vector<1x256xf32>
    %c4_12 = arith.constant 4 : index
    %c0_13 = arith.constant 0 : index
    %93 = vector.load %arg2[%c4_12, %c0_13] : memref<10x256xf32, #tpu.memory_space<vmem>>, vector<1x256xf32>
    %94 = vector.shape_cast %93 : vector<1x256xf32> to vector<256xf32>
    %95 = vector.shape_cast %94 : vector<256xf32> to vector<1x256xf32>
    %c9_14 = arith.constant 9 : index
    %c0_15 = arith.constant 0 : index
    %96 = vector.load %arg2[%c9_14, %c0_15] : memref<10x256xf32, #tpu.memory_space<vmem>>, vector<1x256xf32>
    %97 = vector.shape_cast %96 : vector<1x256xf32> to vector<256xf32>
    %98 = vector.shape_cast %97 : vector<256xf32> to vector<1x256xf32>
    %c0_16 = arith.constant 0 : index
    %c0_17 = arith.constant 0 : index
    %c0_18 = arith.constant 0 : index
    %99 = vector.load %arg3[%c0_16, %c0_17, %c0_18] : memref<8x4x256xf32, #tpu.memory_space<vmem>>, vector<8x1x256xf32>
    %100 = vector.shape_cast %99 : vector<8x1x256xf32> to vector<8x256xf32>
    %c0_19 = arith.constant 0 : index
    %c1_20 = arith.constant 1 : index
    %c0_21 = arith.constant 0 : index
    %101 = vector.load %arg3[%c0_19, %c1_20, %c0_21] : memref<8x4x256xf32, #tpu.memory_space<vmem>>, vector<8x1x256xf32>
    %102 = vector.shape_cast %101 : vector<8x1x256xf32> to vector<8x256xf32>
    %103 = arith.addf %100, %102 : vector<8x256xf32>
    %104 = arith.maximumf %100, %102 : vector<8x256xf32>
    %105 = arith.minimumf %100, %102 : vector<8x256xf32>
    %c0_22 = arith.constant 0 : index
    %c2_23 = arith.constant 2 : index
    %c0_24 = arith.constant 0 : index
    %106 = vector.load %arg3[%c0_22, %c2_23, %c0_24] : memref<8x4x256xf32, #tpu.memory_space<vmem>>, vector<8x1x256xf32>
    %107 = vector.shape_cast %106 : vector<8x1x256xf32> to vector<8x256xf32>
    %108 = arith.addf %103, %107 : vector<8x256xf32>
    %109 = arith.maximumf %104, %107 : vector<8x256xf32>
    %110 = arith.minimumf %105, %107 : vector<8x256xf32>
    %c0_25 = arith.constant 0 : index
    %c3_26 = arith.constant 3 : index
    %c0_27 = arith.constant 0 : index
    %111 = vector.load %arg3[%c0_25, %c3_26, %c0_27] : memref<8x4x256xf32, #tpu.memory_space<vmem>>, vector<8x1x256xf32>
    %112 = vector.shape_cast %111 : vector<8x1x256xf32> to vector<8x256xf32>
    %113 = arith.addf %108, %112 : vector<8x256xf32>
    %114 = arith.maximumf %109, %112 : vector<8x256xf32>
    %115 = arith.minimumf %110, %112 : vector<8x256xf32>
    %cst = arith.constant 2.500000e-01 : f32
    %116 = vector.broadcast %cst : f32 to vector<8x256xf32>
    %117 = arith.mulf %113, %116 : vector<8x256xf32>
    %c32_i32 = arith.constant 32 : i32
    %118 = tpu.dynamic_rotate %117 by %c32_i32 dim 1 : vector<8x256xf32>, i32 -> vector<8x256xf32>
    %119 = vector.broadcast %77 : vector<1x256xf32> to vector<8x256xf32>
    %120 = arith.mulf %118, %119 : vector<8x256xf32>
    %121 = vector.broadcast %0 : f32 to vector<8x256xf32>
    %122 = arith.mulf %120, %121 : vector<8x256xf32>
    %123 = vector.broadcast %1 : f32 to vector<8x256xf32>
    %124 = arith.mulf %120, %123 : vector<8x256xf32>
    %125 = vector.broadcast %2 : f32 to vector<8x256xf32>
    %126 = arith.mulf %120, %125 : vector<8x256xf32>
    %127 = vector.broadcast %3 : f32 to vector<8x256xf32>
    %128 = arith.mulf %120, %127 : vector<8x256xf32>
    %129 = vector.broadcast %4 : f32 to vector<8x256xf32>
    %130 = arith.mulf %120, %129 : vector<8x256xf32>
    %c16_i32 = arith.constant 16 : i32
    %131 = tpu.dynamic_rotate %117 by %c16_i32 dim 1 : vector<8x256xf32>, i32 -> vector<8x256xf32>
    %132 = vector.broadcast %83 : vector<1x256xf32> to vector<8x256xf32>
    %133 = arith.mulf %131, %132 : vector<8x256xf32>
    %134 = vector.broadcast %5 : f32 to vector<8x256xf32>
    %135 = arith.mulf %133, %134 : vector<8x256xf32>
    %136 = arith.addf %122, %135 : vector<8x256xf32>
    %137 = vector.broadcast %6 : f32 to vector<8x256xf32>
    %138 = arith.mulf %133, %137 : vector<8x256xf32>
    %139 = arith.addf %124, %138 : vector<8x256xf32>
    %140 = vector.broadcast %7 : f32 to vector<8x256xf32>
    %141 = arith.mulf %133, %140 : vector<8x256xf32>
    %142 = arith.addf %126, %141 : vector<8x256xf32>
    %143 = vector.broadcast %8 : f32 to vector<8x256xf32>
    %144 = arith.mulf %133, %143 : vector<8x256xf32>
    %145 = arith.addf %128, %144 : vector<8x256xf32>
    %146 = vector.broadcast %9 : f32 to vector<8x256xf32>
    %147 = arith.mulf %133, %146 : vector<8x256xf32>
    %148 = arith.addf %130, %147 : vector<8x256xf32>
    %149 = vector.broadcast %10 : f32 to vector<8x256xf32>
    %150 = arith.mulf %117, %149 : vector<8x256xf32>
    %151 = arith.addf %136, %150 : vector<8x256xf32>
    %152 = vector.broadcast %11 : f32 to vector<8x256xf32>
    %153 = arith.mulf %117, %152 : vector<8x256xf32>
    %154 = arith.addf %139, %153 : vector<8x256xf32>
    %155 = vector.broadcast %12 : f32 to vector<8x256xf32>
    %156 = arith.mulf %117, %155 : vector<8x256xf32>
    %157 = arith.addf %142, %156 : vector<8x256xf32>
    %158 = vector.broadcast %13 : f32 to vector<8x256xf32>
    %159 = arith.mulf %117, %158 : vector<8x256xf32>
    %160 = arith.addf %145, %159 : vector<8x256xf32>
    %161 = vector.broadcast %14 : f32 to vector<8x256xf32>
    %162 = arith.mulf %117, %161 : vector<8x256xf32>
    %163 = arith.addf %148, %162 : vector<8x256xf32>
    %c240_i32 = arith.constant 240 : i32
    %164 = tpu.dynamic_rotate %117 by %c240_i32 dim 1 : vector<8x256xf32>, i32 -> vector<8x256xf32>
    %165 = vector.broadcast %89 : vector<1x256xf32> to vector<8x256xf32>
    %166 = arith.mulf %164, %165 : vector<8x256xf32>
    %167 = vector.broadcast %15 : f32 to vector<8x256xf32>
    %168 = arith.mulf %166, %167 : vector<8x256xf32>
    %169 = arith.addf %151, %168 : vector<8x256xf32>
    %170 = vector.broadcast %16 : f32 to vector<8x256xf32>
    %171 = arith.mulf %166, %170 : vector<8x256xf32>
    %172 = arith.addf %154, %171 : vector<8x256xf32>
    %173 = vector.broadcast %17 : f32 to vector<8x256xf32>
    %174 = arith.mulf %166, %173 : vector<8x256xf32>
    %175 = arith.addf %157, %174 : vector<8x256xf32>
    %176 = vector.broadcast %18 : f32 to vector<8x256xf32>
    %177 = arith.mulf %166, %176 : vector<8x256xf32>
    %178 = arith.addf %160, %177 : vector<8x256xf32>
    %179 = vector.broadcast %19 : f32 to vector<8x256xf32>
    %180 = arith.mulf %166, %179 : vector<8x256xf32>
    %181 = arith.addf %163, %180 : vector<8x256xf32>
    %c224_i32 = arith.constant 224 : i32
    %182 = tpu.dynamic_rotate %117 by %c224_i32 dim 1 : vector<8x256xf32>, i32 -> vector<8x256xf32>
    %183 = vector.broadcast %95 : vector<1x256xf32> to vector<8x256xf32>
    %184 = arith.mulf %182, %183 : vector<8x256xf32>
    %185 = vector.broadcast %20 : f32 to vector<8x256xf32>
    %186 = arith.mulf %184, %185 : vector<8x256xf32>
    %187 = arith.addf %169, %186 : vector<8x256xf32>
    %188 = vector.broadcast %21 : f32 to vector<8x256xf32>
    %189 = arith.mulf %184, %188 : vector<8x256xf32>
    %190 = arith.addf %172, %189 : vector<8x256xf32>
    %191 = vector.broadcast %22 : f32 to vector<8x256xf32>
    %192 = arith.mulf %184, %191 : vector<8x256xf32>
    %193 = arith.addf %175, %192 : vector<8x256xf32>
    %194 = vector.broadcast %23 : f32 to vector<8x256xf32>
    %195 = arith.mulf %184, %194 : vector<8x256xf32>
    %196 = arith.addf %178, %195 : vector<8x256xf32>
    %197 = vector.broadcast %24 : f32 to vector<8x256xf32>
    %198 = arith.mulf %184, %197 : vector<8x256xf32>
    %199 = arith.addf %181, %198 : vector<8x256xf32>
    %c32_i32_28 = arith.constant 32 : i32
    %200 = tpu.dynamic_rotate %114 by %c32_i32_28 dim 1 : vector<8x256xf32>, i32 -> vector<8x256xf32>
    %201 = vector.broadcast %77 : vector<1x256xf32> to vector<8x256xf32>
    %202 = arith.mulf %200, %201 : vector<8x256xf32>
    %203 = vector.broadcast %25 : f32 to vector<8x256xf32>
    %204 = arith.mulf %202, %203 : vector<8x256xf32>
    %205 = arith.addf %187, %204 : vector<8x256xf32>
    %206 = vector.broadcast %26 : f32 to vector<8x256xf32>
    %207 = arith.mulf %202, %206 : vector<8x256xf32>
    %208 = arith.addf %190, %207 : vector<8x256xf32>
    %209 = vector.broadcast %27 : f32 to vector<8x256xf32>
    %210 = arith.mulf %202, %209 : vector<8x256xf32>
    %211 = arith.addf %193, %210 : vector<8x256xf32>
    %212 = vector.broadcast %28 : f32 to vector<8x256xf32>
    %213 = arith.mulf %202, %212 : vector<8x256xf32>
    %214 = arith.addf %196, %213 : vector<8x256xf32>
    %215 = vector.broadcast %29 : f32 to vector<8x256xf32>
    %216 = arith.mulf %202, %215 : vector<8x256xf32>
    %217 = arith.addf %199, %216 : vector<8x256xf32>
    %c16_i32_29 = arith.constant 16 : i32
    %218 = tpu.dynamic_rotate %114 by %c16_i32_29 dim 1 : vector<8x256xf32>, i32 -> vector<8x256xf32>
    %219 = vector.broadcast %83 : vector<1x256xf32> to vector<8x256xf32>
    %220 = arith.mulf %218, %219 : vector<8x256xf32>
    %221 = vector.broadcast %30 : f32 to vector<8x256xf32>
    %222 = arith.mulf %220, %221 : vector<8x256xf32>
    %223 = arith.addf %205, %222 : vector<8x256xf32>
    %224 = vector.broadcast %31 : f32 to vector<8x256xf32>
    %225 = arith.mulf %220, %224 : vector<8x256xf32>
    %226 = arith.addf %208, %225 : vector<8x256xf32>
    %227 = vector.broadcast %32 : f32 to vector<8x256xf32>
    %228 = arith.mulf %220, %227 : vector<8x256xf32>
    %229 = arith.addf %211, %228 : vector<8x256xf32>
    %230 = vector.broadcast %33 : f32 to vector<8x256xf32>
    %231 = arith.mulf %220, %230 : vector<8x256xf32>
    %232 = arith.addf %214, %231 : vector<8x256xf32>
    %233 = vector.broadcast %34 : f32 to vector<8x256xf32>
    %234 = arith.mulf %220, %233 : vector<8x256xf32>
    %235 = arith.addf %217, %234 : vector<8x256xf32>
    %236 = vector.broadcast %35 : f32 to vector<8x256xf32>
    %237 = arith.mulf %114, %236 : vector<8x256xf32>
    %238 = arith.addf %223, %237 : vector<8x256xf32>
    %239 = vector.broadcast %36 : f32 to vector<8x256xf32>
    %240 = arith.mulf %114, %239 : vector<8x256xf32>
    %241 = arith.addf %226, %240 : vector<8x256xf32>
    %242 = vector.broadcast %37 : f32 to vector<8x256xf32>
    %243 = arith.mulf %114, %242 : vector<8x256xf32>
    %244 = arith.addf %229, %243 : vector<8x256xf32>
    %245 = vector.broadcast %38 : f32 to vector<8x256xf32>
    %246 = arith.mulf %114, %245 : vector<8x256xf32>
    %247 = arith.addf %232, %246 : vector<8x256xf32>
    %248 = vector.broadcast %39 : f32 to vector<8x256xf32>
    %249 = arith.mulf %114, %248 : vector<8x256xf32>
    %250 = arith.addf %235, %249 : vector<8x256xf32>
    %c240_i32_30 = arith.constant 240 : i32
    %251 = tpu.dynamic_rotate %114 by %c240_i32_30 dim 1 : vector<8x256xf32>, i32 -> vector<8x256xf32>
    %252 = vector.broadcast %89 : vector<1x256xf32> to vector<8x256xf32>
    %253 = arith.mulf %251, %252 : vector<8x256xf32>
    %254 = vector.broadcast %40 : f32 to vector<8x256xf32>
    %255 = arith.mulf %253, %254 : vector<8x256xf32>
    %256 = arith.addf %238, %255 : vector<8x256xf32>
    %257 = vector.broadcast %41 : f32 to vector<8x256xf32>
    %258 = arith.mulf %253, %257 : vector<8x256xf32>
    %259 = arith.addf %241, %258 : vector<8x256xf32>
    %260 = vector.broadcast %42 : f32 to vector<8x256xf32>
    %261 = arith.mulf %253, %260 : vector<8x256xf32>
    %262 = arith.addf %244, %261 : vector<8x256xf32>
    %263 = vector.broadcast %43 : f32 to vector<8x256xf32>
    %264 = arith.mulf %253, %263 : vector<8x256xf32>
    %265 = arith.addf %247, %264 : vector<8x256xf32>
    %266 = vector.broadcast %44 : f32 to vector<8x256xf32>
    %267 = arith.mulf %253, %266 : vector<8x256xf32>
    %268 = arith.addf %250, %267 : vector<8x256xf32>
    %c224_i32_31 = arith.constant 224 : i32
    %269 = tpu.dynamic_rotate %114 by %c224_i32_31 dim 1 : vector<8x256xf32>, i32 -> vector<8x256xf32>
    %270 = vector.broadcast %95 : vector<1x256xf32> to vector<8x256xf32>
    %271 = arith.mulf %269, %270 : vector<8x256xf32>
    %272 = vector.broadcast %45 : f32 to vector<8x256xf32>
    %273 = arith.mulf %271, %272 : vector<8x256xf32>
    %274 = arith.addf %256, %273 : vector<8x256xf32>
    %275 = vector.broadcast %46 : f32 to vector<8x256xf32>
    %276 = arith.mulf %271, %275 : vector<8x256xf32>
    %277 = arith.addf %259, %276 : vector<8x256xf32>
    %278 = vector.broadcast %47 : f32 to vector<8x256xf32>
    %279 = arith.mulf %271, %278 : vector<8x256xf32>
    %280 = arith.addf %262, %279 : vector<8x256xf32>
    %281 = vector.broadcast %48 : f32 to vector<8x256xf32>
    %282 = arith.mulf %271, %281 : vector<8x256xf32>
    %283 = arith.addf %265, %282 : vector<8x256xf32>
    %284 = vector.broadcast %49 : f32 to vector<8x256xf32>
    %285 = arith.mulf %271, %284 : vector<8x256xf32>
    %286 = arith.addf %268, %285 : vector<8x256xf32>
    %c32_i32_32 = arith.constant 32 : i32
    %287 = tpu.dynamic_rotate %115 by %c32_i32_32 dim 1 : vector<8x256xf32>, i32 -> vector<8x256xf32>
    %288 = vector.broadcast %77 : vector<1x256xf32> to vector<8x256xf32>
    %289 = arith.mulf %287, %288 : vector<8x256xf32>
    %290 = vector.broadcast %50 : f32 to vector<8x256xf32>
    %291 = arith.mulf %289, %290 : vector<8x256xf32>
    %292 = arith.addf %274, %291 : vector<8x256xf32>
    %293 = vector.broadcast %51 : f32 to vector<8x256xf32>
    %294 = arith.mulf %289, %293 : vector<8x256xf32>
    %295 = arith.addf %277, %294 : vector<8x256xf32>
    %296 = vector.broadcast %52 : f32 to vector<8x256xf32>
    %297 = arith.mulf %289, %296 : vector<8x256xf32>
    %298 = arith.addf %280, %297 : vector<8x256xf32>
    %299 = vector.broadcast %53 : f32 to vector<8x256xf32>
    %300 = arith.mulf %289, %299 : vector<8x256xf32>
    %301 = arith.addf %283, %300 : vector<8x256xf32>
    %302 = vector.broadcast %54 : f32 to vector<8x256xf32>
    %303 = arith.mulf %289, %302 : vector<8x256xf32>
    %304 = arith.addf %286, %303 : vector<8x256xf32>
    %c16_i32_33 = arith.constant 16 : i32
    %305 = tpu.dynamic_rotate %115 by %c16_i32_33 dim 1 : vector<8x256xf32>, i32 -> vector<8x256xf32>
    %306 = vector.broadcast %83 : vector<1x256xf32> to vector<8x256xf32>
    %307 = arith.mulf %305, %306 : vector<8x256xf32>
    %308 = vector.broadcast %55 : f32 to vector<8x256xf32>
    %309 = arith.mulf %307, %308 : vector<8x256xf32>
    %310 = arith.addf %292, %309 : vector<8x256xf32>
    %311 = vector.broadcast %56 : f32 to vector<8x256xf32>
    %312 = arith.mulf %307, %311 : vector<8x256xf32>
    %313 = arith.addf %295, %312 : vector<8x256xf32>
    %314 = vector.broadcast %57 : f32 to vector<8x256xf32>
    %315 = arith.mulf %307, %314 : vector<8x256xf32>
    %316 = arith.addf %298, %315 : vector<8x256xf32>
    %317 = vector.broadcast %58 : f32 to vector<8x256xf32>
    %318 = arith.mulf %307, %317 : vector<8x256xf32>
    %319 = arith.addf %301, %318 : vector<8x256xf32>
    %320 = vector.broadcast %59 : f32 to vector<8x256xf32>
    %321 = arith.mulf %307, %320 : vector<8x256xf32>
    %322 = arith.addf %304, %321 : vector<8x256xf32>
    %323 = vector.broadcast %60 : f32 to vector<8x256xf32>
    %324 = arith.mulf %115, %323 : vector<8x256xf32>
    %325 = arith.addf %310, %324 : vector<8x256xf32>
    %326 = vector.broadcast %61 : f32 to vector<8x256xf32>
    %327 = arith.mulf %115, %326 : vector<8x256xf32>
    %328 = arith.addf %313, %327 : vector<8x256xf32>
    %329 = vector.broadcast %62 : f32 to vector<8x256xf32>
    %330 = arith.mulf %115, %329 : vector<8x256xf32>
    %331 = arith.addf %316, %330 : vector<8x256xf32>
    %332 = vector.broadcast %63 : f32 to vector<8x256xf32>
    %333 = arith.mulf %115, %332 : vector<8x256xf32>
    %334 = arith.addf %319, %333 : vector<8x256xf32>
    %335 = vector.broadcast %64 : f32 to vector<8x256xf32>
    %336 = arith.mulf %115, %335 : vector<8x256xf32>
    %337 = arith.addf %322, %336 : vector<8x256xf32>
    %c240_i32_34 = arith.constant 240 : i32
    %338 = tpu.dynamic_rotate %115 by %c240_i32_34 dim 1 : vector<8x256xf32>, i32 -> vector<8x256xf32>
    %339 = vector.broadcast %89 : vector<1x256xf32> to vector<8x256xf32>
    %340 = arith.mulf %338, %339 : vector<8x256xf32>
    %341 = vector.broadcast %65 : f32 to vector<8x256xf32>
    %342 = arith.mulf %340, %341 : vector<8x256xf32>
    %343 = arith.addf %325, %342 : vector<8x256xf32>
    %344 = vector.broadcast %66 : f32 to vector<8x256xf32>
    %345 = arith.mulf %340, %344 : vector<8x256xf32>
    %346 = arith.addf %328, %345 : vector<8x256xf32>
    %347 = vector.broadcast %67 : f32 to vector<8x256xf32>
    %348 = arith.mulf %340, %347 : vector<8x256xf32>
    %349 = arith.addf %331, %348 : vector<8x256xf32>
    %350 = vector.broadcast %68 : f32 to vector<8x256xf32>
    %351 = arith.mulf %340, %350 : vector<8x256xf32>
    %352 = arith.addf %334, %351 : vector<8x256xf32>
    %353 = vector.broadcast %69 : f32 to vector<8x256xf32>
    %354 = arith.mulf %340, %353 : vector<8x256xf32>
    %355 = arith.addf %337, %354 : vector<8x256xf32>
    %c224_i32_35 = arith.constant 224 : i32
    %356 = tpu.dynamic_rotate %115 by %c224_i32_35 dim 1 : vector<8x256xf32>, i32 -> vector<8x256xf32>
    %357 = vector.broadcast %95 : vector<1x256xf32> to vector<8x256xf32>
    %358 = arith.mulf %356, %357 : vector<8x256xf32>
    %359 = vector.broadcast %70 : f32 to vector<8x256xf32>
    %360 = arith.mulf %358, %359 : vector<8x256xf32>
    %361 = arith.addf %343, %360 : vector<8x256xf32>
    %362 = vector.broadcast %71 : f32 to vector<8x256xf32>
    %363 = arith.mulf %358, %362 : vector<8x256xf32>
    %364 = arith.addf %346, %363 : vector<8x256xf32>
    %365 = vector.broadcast %72 : f32 to vector<8x256xf32>
    %366 = arith.mulf %358, %365 : vector<8x256xf32>
    %367 = arith.addf %349, %366 : vector<8x256xf32>
    %368 = vector.broadcast %73 : f32 to vector<8x256xf32>
    %369 = arith.mulf %358, %368 : vector<8x256xf32>
    %370 = arith.addf %352, %369 : vector<8x256xf32>
    %371 = vector.broadcast %74 : f32 to vector<8x256xf32>
    %372 = arith.mulf %358, %371 : vector<8x256xf32>
    %373 = arith.addf %355, %372 : vector<8x256xf32>
    %c2_i32 = arith.constant 2 : i32
    %374 = tpu.dynamic_rotate %361 by %c2_i32 dim 1 : vector<8x256xf32>, i32 -> vector<8x256xf32>
    %375 = vector.broadcast %80 : vector<1x256xf32> to vector<8x256xf32>
    %376 = arith.mulf %374, %375 : vector<8x256xf32>
    %c1_i32 = arith.constant 1 : i32
    %377 = tpu.dynamic_rotate %364 by %c1_i32 dim 1 : vector<8x256xf32>, i32 -> vector<8x256xf32>
    %378 = vector.broadcast %86 : vector<1x256xf32> to vector<8x256xf32>
    %379 = arith.mulf %377, %378 : vector<8x256xf32>
    %380 = arith.addf %376, %379 : vector<8x256xf32>
    %381 = arith.addf %380, %367 : vector<8x256xf32>
    %c255_i32 = arith.constant 255 : i32
    %382 = tpu.dynamic_rotate %370 by %c255_i32 dim 1 : vector<8x256xf32>, i32 -> vector<8x256xf32>
    %383 = vector.broadcast %92 : vector<1x256xf32> to vector<8x256xf32>
    %384 = arith.mulf %382, %383 : vector<8x256xf32>
    %385 = arith.addf %381, %384 : vector<8x256xf32>
    %c254_i32 = arith.constant 254 : i32
    %386 = tpu.dynamic_rotate %373 by %c254_i32 dim 1 : vector<8x256xf32>, i32 -> vector<8x256xf32>
    %387 = vector.broadcast %98 : vector<1x256xf32> to vector<8x256xf32>
    %388 = arith.mulf %386, %387 : vector<8x256xf32>
    %389 = arith.addf %385, %388 : vector<8x256xf32>
    %390 = arith.negf %389 : vector<8x256xf32>
    %391 = math.exp %390 : vector<8x256xf32>
    %cst_36 = arith.constant 1.000000e+00 : f32
    %392 = vector.broadcast %cst_36 : f32 to vector<8x256xf32>
    %393 = arith.addf %392, %391 : vector<8x256xf32>
    %394 = arith.divf %392, %393 : vector<8x256xf32>
    %c0_37 = arith.constant 0 : index
    %c0_38 = arith.constant 0 : index
    %395 = vector.load %arg4[%c0_37, %c0_38] : memref<8x256xf32, #tpu.memory_space<vmem>>, vector<8x256xf32>
    tpu.vector_store %arg4[%c0_37, %c0_38], %394 {strides = array<i32>} : memref<8x256xf32, #tpu.memory_space<vmem>>, vector<8x256xf32>,
    return
  }
  func.func @transform_0(%arg0: i32) -> i32 {
    %c0_i32 = arith.constant 0 : i32
    %c0_i32_0 = arith.constant 0 : i32
    return %c0_i32 : i32
  }
  func.func @transform_1(%arg0: i32) -> (i32, i32) {
    %c0_i32 = arith.constant 0 : i32
    %c0_i32_0 = arith.constant 0 : i32
    %c0_i32_1 = arith.constant 0 : i32
    return %c0_i32, %c0_i32_0 : i32, i32
  }
  func.func @transform_2(%arg0: i32) -> (i32, i32, i32) {
    %c0_i32 = arith.constant 0 : i32
    %c0_i32_0 = arith.constant 0 : i32
    %c0_i32_1 = arith.constant 0 : i32
    return %arg0, %c0_i32, %c0_i32_0 : i32, i32, i32
  }
  func.func @transform_3(%arg0: i32) -> (i32, i32) {
    %c0_i32 = arith.constant 0 : i32
    %c0_i32_0 = arith.constant 0 : i32
    return %arg0, %c0_i32 : i32, i32
  }
}

</mosaic_0001>

<llo_original>
// kernel: tpu_custom_call.1
$region0: #{tpu_custom_call.1}
  #allocation0 [shape = 'u32[]', space=smem, size = 0x4, offset = 0x4, fixed_abs, tag = 'smem constant byte address 0x4 - core index']
  #allocation1 [shape = 'u32[144,128]{1,0:T(1,128)}', space=vmem, size = 0x12000, scoped, tag = 'internal scratch']
  %s0 = inlined_call_operand.hbm [shape: f32[75], index: 0, kind: input, shape index: {}]
  %s1 = inlined_call_operand.hbm [shape: f32[10,256], index: 1, kind: input, shape index: {}]
  %s2 = inlined_call_operand.hbm [shape: f32[16,4,256], index: 2, kind: input, shape index: {}]
  %s3 = inlined_call_operand.hbm [shape: f32[16,256], index: 3, kind: output, shape index: {}]
  %s4 = sld [smem:[#allocation0]]
  $region57: #{tpu_custom_call.1} parent=0
    _
  %s6 = ssub.s32 1, %s4
  %s7 = scalar_select 0, %s6, %s4
  $region1: #{tpu_custom_call.1} parent=0
    #allocation2 [shape = 'u8[512]{0}', space=smem, size = 0x200, scoped, tag = 'input window, operand 0, single buffered']
    #allocation3 [shape = 's32[2]{0}', space=sflag, size = 0x8, scoped, tag = 'scoped memory for tpu_custom_call.1']
    #allocation4 [shape = 's32[2]{0}', space=sflag, size = 0x8, scoped, tag = 'scoped memory for tpu_custom_call.1']
    #allocation5 [shape = 's32[2]{0}', space=sflag, size = 0x8, scoped, tag = 'scoped memory for tpu_custom_call.1']
    #allocation6 [shape = 'u8[16384]{0}', space=vmem, size = 0x4000, scoped, tag = 'input window, operand 1, single buffered']
    #allocation7 [shape = 'u8[65536]{0}', space=vmem, size = 0x10000, scoped, tag = 'input window, operand 2']
    #allocation8 [shape = 's32[2]{0}', space=sflag, size = 0x8, scoped, tag = 'scoped memory for tpu_custom_call.1']
    #allocation9 [shape = 'u8[16384]{0}', space=vmem, size = 0x4000, scoped, tag = 'output window, operand 0']
    %8 = vsyncpa [#allocation5], 0
    %9 = vsyncpa [#allocation3], 0
    %10 = vsyncpa [#allocation8], 0
    %s11 = scalar_lea.sflag [#allocation8], 1
    %12 = vsyncpa %s11, 0
    %13 = vsyncpa [#allocation4], 0
    %s14 = scalar_lea.sflag [#allocation4], 1
    %15 = vsyncpa %s14, 0
    loop: start=0, step=1, limit=4
    $region2: #{tpu_custom_call.1} parent=1 // loop_pre_header
      _
    $region3: #{tpu_custom_call.1} parent=1 // loop_header
      %s17 = sphi 0, %s21
      %p18 = scmp.ge.s32.totalorder %s17, 4
      %s25 = sphi 0, %s25
      %s27 = sphi 0, %s25
      %s28 = sphi 0, %s27
      %s42 = sphi 0, %s28
      %s46 = sphi 0, %s46
      %s48 = sphi 0, %s46
      %s49 = sphi 0, %s48
      %s63 = sphi 0, %s49
      %s69 = sphi 0, %s71
      %s72 = sphi 0, %s69
      %s73 = sphi 0, %s72
      %s89 = sphi 0, %s73
      %s95 = sphi 0, %s97
      %s98 = sphi 0, %s95
      %s99 = sphi 0, %s98
      %s115 = sphi 0, %s99
    $region4: #{tpu_custom_call.1} parent=1 // loop_header_branch
      %20 = sbr.rel (%p18) target = $region8
    $region5: #{tpu_custom_call.1} parent=1 // loop_body
      %s22 = ssub.s32 %s17, 1
      %s23 = ssub.s32 %s17, 2
      %s24 = sadd.s32 %s17, 1
      %s26 = sadd.s32 %s25, 1
      %p29 = scmp.eq.s32.totalorder %s17, 1
      %p30 = scmp.ne.s32.totalorder %s25, %s27
      %p31 = scmp.eq.s32.totalorder %s17, 0
      %p32 = por %p30, %p31
      %p33 = scmp.ne.s32.totalorder %s25, %s27
      %p34 = scmp.eq.s32.totalorder %s22, 1
      %p35 = por %p33, %p34
      %p36 = scmp.ne.s32.totalorder %s27, %s28
      %p37 = scmp.eq.s32.totalorder %s22, 0
      %p38 = por %p36, %p37
      %p39 = scmp.ne.s32.totalorder %s27, %s28
      %p40 = scmp.eq.s32.totalorder %s23, 1
      %p41 = por %p39, %p40
      %p43 = scmp.ne.s32.totalorder %s28, %s42
      %p44 = scmp.eq.s32.totalorder %s23, 0
      %p45 = por %p43, %p44
      %s47 = sadd.s32 %s46, 1
      %p50 = scmp.eq.s32.totalorder %s17, 1
      %p51 = scmp.ne.s32.totalorder %s46, %s48
      %p52 = scmp.eq.s32.totalorder %s17, 0
      %p53 = por %p51, %p52
      %p54 = scmp.ne.s32.totalorder %s46, %s48
      %p55 = scmp.eq.s32.totalorder %s22, 1
      %p56 = por %p54, %p55
      %p57 = scmp.ne.s32.totalorder %s48, %s49
      %p58 = scmp.eq.s32.totalorder %s22, 0
      %p59 = por %p57, %p58
      %p60 = scmp.ne.s32.totalorder %s48, %s49
      %p61 = scmp.eq.s32.totalorder %s23, 1
      %p62 = por %p60, %p61
      %p64 = scmp.ne.s32.totalorder %s49, %s63
      %p65 = scmp.eq.s32.totalorder %s23, 0
      %p66 = por %p64, %p65
      %s67 = ssub.s32 %s17, %s24
      %p68 = scmp.eq.s32.totalorder %s67, 0
      %s70 = sadd.s32 %s69, 1
      %s71 = scalar_select %p68, %s69, %s70
      %p74 = pneg %p68
      %p75 = scmp.eq.s32.totalorder %s17, 1
      %p76 = por %p74, %p75
      %p77 = scmp.ne.s32.totalorder %s69, %s72
      %p78 = scmp.eq.s32.totalorder %s17, 0
      %p79 = por %p77, %p78
      %p80 = scmp.ne.s32.totalorder %s69, %s72
      %p81 = scmp.eq.s32.totalorder %s22, 1
      %p82 = por %p80, %p81
      %p83 = scmp.ne.s32.totalorder %s72, %s73
      %p84 = scmp.eq.s32.totalorder %s22, 0
      %p85 = por %p83, %p84
      %p86 = scmp.ne.s32.totalorder %s72, %s73
      %p87 = scmp.eq.s32.totalorder %s23, 1
      %p88 = por %p86, %p87
      %p90 = scmp.ne.s32.totalorder %s73, %s89
      %p91 = scmp.eq.s32.totalorder %s23, 0
      %p92 = por %p90, %p91
      %s93 = ssub.s32 %s17, %s24
      %p94 = scmp.eq.s32.totalorder %s93, 0
      %s96 = sadd.s32 %s95, 1
      %s97 = scalar_select %p94, %s95, %s96
      %p100 = pneg %p94
      %p101 = scmp.eq.s32.totalorder %s17, 1
      %p102 = por %p100, %p101
      %p103 = scmp.ne.s32.totalorder %s95, %s98
      %p104 = scmp.eq.s32.totalorder %s17, 0
      %p105 = por %p103, %p104
      %p106 = scmp.ne.s32.totalorder %s95, %s98
      %p107 = scmp.eq.s32.totalorder %s22, 1
      %p108 = por %p106, %p107
      %p109 = scmp.ne.s32.totalorder %s98, %s99
      %p110 = scmp.eq.s32.totalorder %s22, 0
      %p111 = por %p109, %p110
      %p112 = scmp.ne.s32.totalorder %s98, %s99
      %p113 = scmp.eq.s32.totalorder %s23, 1
      %p114 = por %p112, %p113
      %p116 = scmp.ne.s32.totalorder %s99, %s115
      %p117 = scmp.eq.s32.totalorder %s23, 0
      %p118 = por %p116, %p117
      %p119 = scmp.le.s32.totalorder 1, %s17
      %p120 = scmp.lt.s32.totalorder %s17, 3
      %p121 = pnand %p119, %p120
      %p122 = pneg %p121
      // Predicated region
      $region9: #{tpu_custom_call.1} parent=5 // pred_check
        _
      $region10: #{tpu_custom_call.1} parent=5 // pred_check_branch
        %124 = sbr.rel (%p121) target = $region12
      $region11: #{tpu_custom_call.1} parent=5 // pred_region
        %s125 = ssub.s32 %s17, 1
        // Predicated region
        $region13: #{tpu_custom_call.1} parent=11 // pred_check
          %p126 = pneg %p38
        $region14: #{tpu_custom_call.1} parent=11 // pred_check_branch
          %128 = sbr.rel (%p126) target = $region16
        $region15: #{tpu_custom_call.1} parent=11 // pred_region
          %s130 = ssub.s32 16, 16
          %131 = vsyncadd [#allocation5], %s130
          %134 = dma.hbm_to_smem %s0, 16, [#allocation2], [#allocation5]
        $region16: #{tpu_custom_call.1} parent=11 // pred_fallthru
          _
        // Predicated region
        $region17: #{tpu_custom_call.1} parent=11 // pred_check
          %p135 = pneg %p59
        $region18: #{tpu_custom_call.1} parent=11 // pred_check_branch
          %137 = sbr.rel (%p135) target = $region20
        $region19: #{tpu_custom_call.1} parent=11 // pred_region
          %s139 = ssub.s32 512, 512
          %140 = vsyncadd [#allocation3], %s139
          %s141 = sshll.u32 [#allocation6], 4
          %s142 = int_to_ptr.vmem [resolvable:$true] %s141
          %147 = dma.hbm_to_vmem [thread:$0]  %s1, 512, %s142, [#allocation3], 256, 256, 16
        $region20: #{tpu_custom_call.1} parent=11 // pred_fallthru
          _
      $region12: #{tpu_custom_call.1} parent=5 // pred_fallthru
        _
      %p148 = scmp.lt.s32.totalorder %s17, 2
      // Predicated region
      $region21: #{tpu_custom_call.1} parent=5 // pred_check
        %p149 = pneg %p148
      $region22: #{tpu_custom_call.1} parent=5 // pred_check_branch
        %151 = sbr.rel (%p149) target = $region24
      $region23: #{tpu_custom_call.1} parent=5 // pred_region
        // Predicated region
        $region25: #{tpu_custom_call.1} parent=23 // pred_check
          %p152 = pneg %p79
        $region26: #{tpu_custom_call.1} parent=23 // pred_check_branch
          %154 = sbr.rel (%p152) target = $region28
        $region27: #{tpu_custom_call.1} parent=23 // pred_region
          %s155 = sand.u32 %s69, 1
          %s156 = scalar_lea.sflag [#allocation8], %s155
          %s157 = sand.u32 %s69, 1
          %s158 = smul.addr %s157, 64
          %s159 = scalar_lea.vmem [#allocation7], %s158
          %s160 = smul.u32 8, %s17
          %s162 = ssub.s32 1024, 1024
          %163 = vsyncadd %s156, %s162
          %s164 = smul.addr %s160, 2
          %s165 = smul.addr %s164, 64
          %s166 = scalar_lea.hbm %s2, %s165
          %s167 = sshll.u32 %s159, 4
          %s168 = int_to_ptr.vmem [resolvable:$true] %s167
          %173 = dma.hbm_to_vmem [thread:$0]  %s166, 1024, %s168, %s156, 128, 128, 8
        $region28: #{tpu_custom_call.1} parent=23 // pred_fallthru
          _
      $region24: #{tpu_custom_call.1} parent=5 // pred_fallthru
        _
      %p174 = scmp.le.s32.totalorder 1, %s17
      %p175 = scmp.lt.s32.totalorder %s17, 3
      %p176 = pnand %p174, %p175
      %p177 = pneg %p176
      // Predicated region
      $region29: #{tpu_custom_call.1} parent=5 // pred_check
        _
      $region30: #{tpu_custom_call.1} parent=5 // pred_check_branch
        %179 = sbr.rel (%p176) target = $region32
      $region31: #{tpu_custom_call.1} parent=5 // pred_region
        %s180 = ssub.s32 %s17, 1
        // Predicated region
        $region33: #{tpu_custom_call.1} parent=31 // pred_check
          %p181 = pneg %p38
        $region34: #{tpu_custom_call.1} parent=31 // pred_check_branch
          %183 = sbr.rel (%p181) target = $region36
        $region35: #{tpu_custom_call.1} parent=31 // pred_region
          %184 = dma.done [#allocation5], 16
        $region36: #{tpu_custom_call.1} parent=31 // pred_fallthru
          _
        // Predicated region
        $region37: #{tpu_custom_call.1} parent=31 // pred_check
          %p185 = pneg %p59
        $region38: #{tpu_custom_call.1} parent=31 // pred_check_branch
          %187 = sbr.rel (%p185) target = $region40
        $region39: #{tpu_custom_call.1} parent=31 // pred_region
          %188 = dma.done [#allocation3], 512
        $region40: #{tpu_custom_call.1} parent=31 // pred_fallthru
          _
        %s189 = sand.u32 %s72, 1
        %s190 = scalar_lea.sflag [#allocation8], %s189
        %s191 = sand.u32 %s72, 1
        %s192 = smul.addr %s191, 64
        %s193 = scalar_lea.vmem [#allocation7], %s192
        // Predicated region
        $region41: #{tpu_custom_call.1} parent=31 // pred_check
          %p194 = pneg %p85
        $region42: #{tpu_custom_call.1} parent=31 // pred_check_branch
          %196 = sbr.rel (%p194) target = $region44
        $region43: #{tpu_custom_call.1} parent=31 // pred_region
          %197 = dma.done %s190, 1024
        $region44: #{tpu_custom_call.1} parent=31 // pred_fallthru
          _
        %198 = sfence
        %p199 = pneg %p38
        %p200 = pneg %p35
        %p201 = pneg %p59
        %p202 = pneg %p56
        %s203 = sand.u32 %s72, 1
        %s204 = scalar_lea.sflag [#allocation8], %s203
        %s205 = sand.u32 %s72, 1
        %s206 = smul.addr %s205, 64
        %s207 = scalar_lea.vmem [#allocation7], %s206
        %p208 = pneg %p85
        %p209 = pneg %p82
        %p210 = pneg %p111
        %p211 = pneg %p108
        %s212 = sand.u32 %s98, 1
        %s213 = scalar_lea.sflag [#allocation4], %s212
        %s214 = sand.u32 %s98, 1
        %s215 = smul.addr %s214, 16
        %s216 = scalar_lea.vmem [#allocation9], %s215
        %s217 = smul.u32 8, %s22
        %s218 = sld [smem:[#allocation2]]
        %s219 = sld [smem:[#allocation2 + $0x1]]
        %s220 = sld [smem:[#allocation2 + $0x2]]
        %s221 = sld [smem:[#allocation2 + $0x3]]
        %s222 = sld [smem:[#allocation2 + $0x4]]
        %s223 = sld [smem:[#allocation2 + $0x5]]
        %s224 = sld [smem:[#allocation2 + $0x6]]
        %s225 = sld [smem:[#allocation2 + $0x7]]
        %s226 = sld [smem:[#allocation2 + $0x8]]
        %s227 = sld [smem:[#allocation2 + $0x9]]
        %s228 = sld [smem:[#allocation2 + $0xa]]
        %s229 = sld [smem:[#allocation2 + $0xb]]
        %s230 = sld [smem:[#allocation2 + $0xc]]
        %s231 = sld [smem:[#allocation2 + $0xd]]
        %s232 = sld [smem:[#allocation2 + $0xe]]
        %s233 = sld [smem:[#allocation2 + $0xf]]
        %s234 = sld [smem:[#allocation2 + $0x10]]
        %s235 = sld [smem:[#allocation2 + $0x11]]
        %s236 = sld [smem:[#allocation2 + $0x12]]
        %s237 = sld [smem:[#allocation2 + $0x13]]
        %s238 = sld [smem:[#allocation2 + $0x14]]
        %s239 = sld [smem:[#allocation2 + $0x15]]
        %s240 = sld [smem:[#allocation2 + $0x16]]
        %s241 = sld [smem:[#allocation2 + $0x17]]
        %s242 = sld [smem:[#allocation2 + $0x18]]
        %s243 = sld [smem:[#allocation2 + $0x19]]
        %s244 = sld [smem:[#allocation2 + $0x1a]]
        %s245 = sld [smem:[#allocation2 + $0x1b]]
        %s246 = sld [smem:[#allocation2 + $0x1c]]
        %s247 = sld [smem:[#allocation2 + $0x1d]]
        %s248 = sld [smem:[#allocation2 + $0x1e]]
        %s249 = sld [smem:[#allocation2 + $0x1f]]
        %s250 = sld [smem:[#allocation2 + $0x20]]
        %s251 = sld [smem:[#allocation2 + $0x21]]
        %s252 = sld [smem:[#allocation2 + $0x22]]
        %s253 = sld [smem:[#allocation2 + $0x23]]
        %s254 = sld [smem:[#allocation2 + $0x24]]
        %s255 = sld [smem:[#allocation2 + $0x25]]
        %s256 = sld [smem:[#allocation2 + $0x26]]
        %s257 = sld [smem:[#allocation2 + $0x27]]
        %s258 = sld [smem:[#allocation2 + $0x28]]
        %s259 = sld [smem:[#allocation2 + $0x29]]
        %s260 = sld [smem:[#allocation2 + $0x2a]]
        %s261 = sld [smem:[#allocation2 + $0x2b]]
        %s262 = sld [smem:[#allocation2 + $0x2c]]
        %s263 = sld [smem:[#allocation2 + $0x2d]]
        %s264 = sld [smem:[#allocation2 + $0x2e]]
        %s265 = sld [smem:[#allocation2 + $0x2f]]
        %s266 = sld [smem:[#allocation2 + $0x30]]
        %s267 = sld [smem:[#allocation2 + $0x31]]
        %s268 = sld [smem:[#allocation2 + $0x32]]
        %s269 = sld [smem:[#allocation2 + $0x33]]
        %s270 = sld [smem:[#allocation2 + $0x34]]
        %s271 = sld [smem:[#allocation2 + $0x35]]
        %s272 = sld [smem:[#allocation2 + $0x36]]
        %s273 = sld [smem:[#allocation2 + $0x37]]
        %s274 = sld [smem:[#allocation2 + $0x38]]
        %s275 = sld [smem:[#allocation2 + $0x39]]
        %s276 = sld [smem:[#allocation2 + $0x3a]]
        %s277 = sld [smem:[#allocation2 + $0x3b]]
        %s278 = sld [smem:[#allocation2 + $0x3c]]
        %s279 = sld [smem:[#allocation2 + $0x3d]]
        %s280 = sld [smem:[#allocation2 + $0x3e]]
        %s281 = sld [smem:[#allocation2 + $0x3f]]
        %s282 = sld [smem:[#allocation2 + $0x40]]
        %s283 = sld [smem:[#allocation2 + $0x41]]
        %s284 = sld [smem:[#allocation2 + $0x42]]
        %s285 = sld [smem:[#allocation2 + $0x43]]
        %s286 = sld [smem:[#allocation2 + $0x44]]
        %s287 = sld [smem:[#allocation2 + $0x45]]
        %s288 = sld [smem:[#allocation2 + $0x46]]
        %s289 = sld [smem:[#allocation2 + $0x47]]
        %s290 = sld [smem:[#allocation2 + $0x48]]
        %s291 = sld [smem:[#allocation2 + $0x49]]
        %s292 = sld [smem:[#allocation2 + $0x4a]]
        %v293 = vld [vmem:[#allocation6] ss:$8 sm:$0x3]
        %s294 = scalar_lea.vmem [#allocation6], 5
        %v295 = vld [vmem:[%s294] ss:$8 sm:$0x3]
        %s296 = scalar_lea.vmem [#allocation6], 1
        %v297 = vld [vmem:[%s296] ss:$8 sm:$0x3]
        %s298 = scalar_lea.vmem [#allocation6], 6
        %v299 = vld [vmem:[%s298] ss:$8 sm:$0x3]
        %s300 = scalar_lea.vmem [#allocation6], 3
        %v301 = vld [vmem:[%s300] ss:$8 sm:$0x3]
        %s302 = scalar_lea.vmem [#allocation6], 16
        %v303 = vld [vmem:[%s302] ss:$8 sm:$0x3]
        %s304 = scalar_lea.vmem [#allocation6], 4
        %v305 = vld [vmem:[%s304] ss:$8 sm:$0x3]
        %s306 = scalar_lea.vmem [#allocation6], 17
        %v307 = vld [vmem:[%s306] ss:$8 sm:$0x3]
        %v308 = vld [vmem:[%s193] ss:$4 sm:$0x3]
        %s309 = scalar_lea.vmem %s193, 8 [#allocation7]
        %v310 = vld [vmem:[%s309] ss:$4 sm:$0x3]
        %s311 = scalar_lea.vmem %s193, 16 [#allocation7]
        %v312 = vld [vmem:[%s311] ss:$4 sm:$0x3]
        %s313 = scalar_lea.vmem %s193, 24 [#allocation7]
        %v314 = vld [vmem:[%s313] ss:$4 sm:$0x3]
        %s315 = scalar_lea.vmem %s193, 32 [#allocation7]
        %v316 = vld [vmem:[%s315] ss:$4 sm:$0x3]
        %s317 = scalar_lea.vmem %s193, 40 [#allocation7]
        %v318 = vld [vmem:[%s317] ss:$4 sm:$0x3]
        %s319 = scalar_lea.vmem %s193, 48 [#allocation7]
        %v320 = vld [vmem:[%s319] ss:$4 sm:$0x3]
        %s321 = scalar_lea.vmem %s193, 56 [#allocation7]
        %v322 = vld [vmem:[%s321] ss:$4 sm:$0x3]
        %s323 = scalar_lea.vmem %s193, 1 [#allocation7]
        %v324 = vld [vmem:[%s323] ss:$4 sm:$0x3]
        %s325 = scalar_lea.vmem %s193, 9 [#allocation7]
        %v326 = vld [vmem:[%s325] ss:$4 sm:$0x3]
        %s327 = scalar_lea.vmem %s193, 17 [#allocation7]
        %v328 = vld [vmem:[%s327] ss:$4 sm:$0x3]
        %s329 = scalar_lea.vmem %s193, 25 [#allocation7]
        %v330 = vld [vmem:[%s329] ss:$4 sm:$0x3]
        %s331 = scalar_lea.vmem %s193, 33 [#allocation7]
        %v332 = vld [vmem:[%s331] ss:$4 sm:$0x3]
        %s333 = scalar_lea.vmem %s193, 41 [#allocation7]
        %v334 = vld [vmem:[%s333] ss:$4 sm:$0x3]
        %s335 = scalar_lea.vmem %s193, 49 [#allocation7]
        %v336 = vld [vmem:[%s335] ss:$4 sm:$0x3]
        %s337 = scalar_lea.vmem %s193, 57 [#allocation7]
        %v338 = vld [vmem:[%s337] ss:$4 sm:$0x3]
        %v339 = vadd.f32 %v308, %v324
        %v340 = vadd.f32 %v310, %v326
        %v341 = vadd.f32 %v312, %v328
        %v342 = vadd.f32 %v314, %v330
        %v343 = vadd.f32 %v316, %v332
        %v344 = vadd.f32 %v318, %v334
        %v345 = vadd.f32 %v320, %v336
        %v346 = vadd.f32 %v322, %v338
        %v347 = vmax.f32 %v308, %v324
        %v348 = vmax.f32 %v310, %v326
        %v349 = vmax.f32 %v312, %v328
        %v350 = vmax.f32 %v314, %v330
        %v351 = vmax.f32 %v316, %v332
        %v352 = vmax.f32 %v318, %v334
        %v353 = vmax.f32 %v320, %v336
        %v354 = vmax.f32 %v322, %v338
        %v355 = vmin.f32 %v308, %v324
        %v356 = vmin.f32 %v310, %v326
        %v357 = vmin.f32 %v312, %v328
        %v358 = vmin.f32 %v314, %v330
        %v359 = vmin.f32 %v316, %v332
        %v360 = vmin.f32 %v318, %v334
        %v361 = vmin.f32 %v320, %v336
        %v362 = vmin.f32 %v322, %v338
        %s363 = scalar_lea.vmem %s193, 2 [#allocation7]
        %v364 = vld [vmem:[%s363] ss:$4 sm:$0x3]
        %s365 = scalar_lea.vmem %s193, 10 [#allocation7]
        %v366 = vld [vmem:[%s365] ss:$4 sm:$0x3]
        %s367 = scalar_lea.vmem %s193, 18 [#allocation7]
        %v368 = vld [vmem:[%s367] ss:$4 sm:$0x3]
        %s369 = scalar_lea.vmem %s193, 26 [#allocation7]
        %v370 = vld [vmem:[%s369] ss:$4 sm:$0x3]
        %s371 = scalar_lea.vmem %s193, 34 [#allocation7]
        %v372 = vld [vmem:[%s371] ss:$4 sm:$0x3]
        %s373 = scalar_lea.vmem %s193, 42 [#allocation7]
        %v374 = vld [vmem:[%s373] ss:$4 sm:$0x3]
        %s375 = scalar_lea.vmem %s193, 50 [#allocation7]
        %v376 = vld [vmem:[%s375] ss:$4 sm:$0x3]
        %s377 = scalar_lea.vmem %s193, 58 [#allocation7]
        %v378 = vld [vmem:[%s377] ss:$4 sm:$0x3]
        %v379 = vadd.f32 %v339, %v364
        %v380 = vadd.f32 %v340, %v366
        %v381 = vadd.f32 %v341, %v368
        %v382 = vadd.f32 %v342, %v370
        %v383 = vadd.f32 %v343, %v372
        %v384 = vadd.f32 %v344, %v374
        %v385 = vadd.f32 %v345, %v376
        %v386 = vadd.f32 %v346, %v378
        %v387 = vmax.f32 %v347, %v364
        %v388 = vmax.f32 %v348, %v366
        %v389 = vmax.f32 %v349, %v368
        %v390 = vmax.f32 %v350, %v370
        %v391 = vmax.f32 %v351, %v372
        %v392 = vmax.f32 %v352, %v374
        %v393 = vmax.f32 %v353, %v376
        %v394 = vmax.f32 %v354, %v378
        %v395 = vmin.f32 %v355, %v364
        %v396 = vmin.f32 %v356, %v366
        %v397 = vmin.f32 %v357, %v368
        %v398 = vmin.f32 %v358, %v370
        %v399 = vmin.f32 %v359, %v372
        %v400 = vmin.f32 %v360, %v374
        %v401 = vmin.f32 %v361, %v376
        %v402 = vmin.f32 %v362, %v378
        %s403 = scalar_lea.vmem %s193, 3 [#allocation7]
        %v404 = vld [vmem:[%s403] ss:$4 sm:$0x3]
        %s405 = scalar_lea.vmem %s193, 11 [#allocation7]
        %v406 = vld [vmem:[%s405] ss:$4 sm:$0x3]
        %s407 = scalar_lea.vmem %s193, 19 [#allocation7]
        %v408 = vld [vmem:[%s407] ss:$4 sm:$0x3]
        %s409 = scalar_lea.vmem %s193, 27 [#allocation7]
        %v410 = vld [vmem:[%s409] ss:$4 sm:$0x3]
        %s411 = scalar_lea.vmem %s193, 35 [#allocation7]
        %v412 = vld [vmem:[%s411] ss:$4 sm:$0x3]
        %s413 = scalar_lea.vmem %s193, 43 [#allocation7]
        %v414 = vld [vmem:[%s413] ss:$4 sm:$0x3]
        %s415 = scalar_lea.vmem %s193, 51 [#allocation7]
        %v416 = vld [vmem:[%s415] ss:$4 sm:$0x3]
        %s417 = scalar_lea.vmem %s193, 59 [#allocation7]
        %v418 = vld [vmem:[%s417] ss:$4 sm:$0x3]
        %v419 = vadd.f32 %v379, %v404
        %v420 = vadd.f32 %v380, %v406
        %v421 = vadd.f32 %v381, %v408
        %v422 = vadd.f32 %v382, %v410
        %v423 = vadd.f32 %v383, %v412
        %v424 = vadd.f32 %v384, %v414
        %v425 = vadd.f32 %v385, %v416
        %v426 = vadd.f32 %v386, %v418
        %v427 = vmax.f32 %v387, %v404
        %v428 = vmax.f32 %v388, %v406
        %v429 = vmax.f32 %v389, %v408
        %v430 = vmax.f32 %v390, %v410
        %v431 = vmax.f32 %v391, %v412
        %v432 = vmax.f32 %v392, %v414
        %v433 = vmax.f32 %v393, %v416
        %v434 = vmax.f32 %v394, %v418
        %v435 = vmin.f32 %v395, %v404
        %v436 = vmin.f32 %v396, %v406
        %v437 = vmin.f32 %v397, %v408
        %v438 = vmin.f32 %v398, %v410
        %v439 = vmin.f32 %v399, %v412
        %v440 = vmin.f32 %v400, %v414
        %v441 = vmin.f32 %v401, %v416
        %v442 = vmin.f32 %v402, %v418
        %v443 = vmul.f32 %v419, 0.25
        %v444 = vmul.f32 %v420, 0.25
        %v445 = vmul.f32 %v421, 0.25
        %v446 = vmul.f32 %v422, 0.25
        %v447 = vmul.f32 %v423, 0.25
        %v448 = vmul.f32 %v424, 0.25
        %v449 = vmul.f32 %v425, 0.25
        %v450 = vmul.f32 %v426, 0.25
        %v459 = vcombine.low %v443, %v444
        %v460 = vcombine.low %v445, %v446
        %v461 = vcombine.low %v447, %v448
        %v462 = vcombine.low %v449, %v450
        %v464 = vunpack.c.l.s4 1966171168
        %v465 = vunpack.c.0.s8 %v464
        %v466 = vlaneseq
        %v467 = vshrl.u32 %v466, 7
        %v468 = vsub.s32 %v465, %v467
        %v469 = vrot.slane %v459, %v468
        %v471 = vunpack.c.l.s4 1966171168
        %v472 = vunpack.c.0.s8 %v471
        %v473 = vlaneseq
        %v474 = vshrl.u32 %v473, 7
        %v475 = vsub.s32 %v472, %v474
        %v476 = vrot.slane %v460, %v475
        %v478 = vunpack.c.l.s4 1966171168
        %v479 = vunpack.c.0.s8 %v478
        %v480 = vlaneseq
        %v481 = vshrl.u32 %v480, 7
        %v482 = vsub.s32 %v479, %v481
        %v483 = vrot.slane %v461, %v482
        %v485 = vunpack.c.l.s4 1966171168
        %v486 = vunpack.c.0.s8 %v485
        %v487 = vlaneseq
        %v488 = vshrl.u32 %v487, 7
        %v489 = vsub.s32 %v486, %v488
        %v490 = vrot.slane %v462, %v489
        %v491 = vcombine.low %v469, %v476
        %v492 = vcombine.high %v469, %v476
        %v493 = vcombine.low %v483, %v490
        %v494 = vcombine.high %v483, %v490
        %v496 = vunpack.c.l.s4 1966171168
        %v497 = vunpack.c.0.s8 %v496
        %v498 = vlaneseq
        %v499 = vshrl.u32 %v498, 7
        %v500 = vsub.s32 %v497, %v499
        %v501 = vrot.slane %v491, %v500
        %v503 = vunpack.c.l.s4 1966171168
        %v504 = vunpack.c.0.s8 %v503
        %v505 = vlaneseq
        %v506 = vshrl.u32 %v505, 7
        %v507 = vsub.s32 %v504, %v506
        %v508 = vrot.slane %v492, %v507
        %v510 = vunpack.c.l.s4 1966171168
        %v511 = vunpack.c.0.s8 %v510
        %v512 = vlaneseq
        %v513 = vshrl.u32 %v512, 7
        %v514 = vsub.s32 %v511, %v513
        %v515 = vrot.slane %v493, %v514
        %v517 = vunpack.c.l.s4 1966171168
        %v518 = vunpack.c.0.s8 %v517
        %v519 = vlaneseq
        %v520 = vshrl.u32 %v519, 7
        %v521 = vsub.s32 %v518, %v520
        %v522 = vrot.slane %v494, %v521
        %v523 = vcombine.low %v501, %v515
        %v524 = vcombine.low %v508, %v522
        %527 = vrot.lane.b32.xlu0 %v523, 32
        %v528 = vpop.permute.xlu0 %527
        %529 = vrot.lane.b32.xlu0 %v524, 32
        %v530 = vpop.permute.xlu0 %529
        %v531 = vlaneseq
        %v532 = vand.u32 %v531, 127
        %vm533 = vcmp.lt.s32.totalorder %v532, 32
        %v534 = vsel %vm533, %v528, %v530
        %v535 = vsel %vm533, %v530, %v528
        %v537 = vlaneseq
        %v538 = vshrl.u32 %v537, 7
        %v539 = vsub.s32 0, %v538
        %v540 = vrot.slane %v293, %v539
        %v541 = vlaneseq
        %v542 = vshrl.u32 %v541, 7
        %v543 = vsub.s32 1, %v542
        %v544 = vrot.slane %v293, %v543
        %v547 = vmul.f32 %v535, %v540
        %v548 = vmul.f32 %v534, %v544
        %v549 = vstv %s218
        %v550 = vmul.f32 %v547, %v549
        %v551 = vmul.f32 %v548, %v549
        %v552 = vstv %s219
        %v553 = vmul.f32 %v547, %v552
        %v554 = vmul.f32 %v548, %v552
        %v555 = vstv %s220
        %v556 = vmul.f32 %v547, %v555
        %v557 = vmul.f32 %v548, %v555
        %v558 = vstv %s221
        %v559 = vmul.f32 %v547, %v558
        %v560 = vmul.f32 %v548, %v558
        %v561 = vstv %s222
        %v562 = vmul.f32 %v547, %v561
        %v563 = vmul.f32 %v548, %v561
        %564 = vrot.lane.b32.xlu0 %v523, 16
        %v565 = vpop.permute.xlu0 %564
        %566 = vrot.lane.b32.xlu0 %v524, 16
        %v567 = vpop.permute.xlu0 %566
        %vm568 = vcmp.lt.s32.totalorder %v532, 16
        %v569 = vsel %vm568, %v565, %v567
        %v570 = vsel %vm568, %v567, %v565
        %v572 = vlaneseq
        %v573 = vshrl.u32 %v572, 7
        %v574 = vsub.s32 0, %v573
        %v575 = vrot.slane %v297, %v574
        %v576 = vlaneseq
        %v577 = vshrl.u32 %v576, 7
        %v578 = vsub.s32 1, %v577
        %v579 = vrot.slane %v297, %v578
        %v582 = vmul.f32 %v570, %v575
        %v583 = vmul.f32 %v569, %v579
        %v584 = vstv %s223
        %v585 = vmul.f32 %v582, %v584
        %v586 = vmul.f32 %v583, %v584
        %v587 = vadd.f32 %v550, %v585
        %v588 = vadd.f32 %v551, %v586
        %v589 = vstv %s224
        %v590 = vmul.f32 %v582, %v589
        %v591 = vmul.f32 %v583, %v589
        %v592 = vadd.f32 %v553, %v590
        %v593 = vadd.f32 %v554, %v591
        %v594 = vstv %s225
        %v595 = vmul.f32 %v582, %v594
        %v596 = vmul.f32 %v583, %v594
        %v597 = vadd.f32 %v556, %v595
        %v598 = vadd.f32 %v557, %v596
        %v599 = vstv %s226
        %v600 = vmul.f32 %v582, %v599
        %v601 = vmul.f32 %v583, %v599
        %v602 = vadd.f32 %v559, %v600
        %v603 = vadd.f32 %v560, %v601
        %v604 = vstv %s227
        %v605 = vmul.f32 %v582, %v604
        %v606 = vmul.f32 %v583, %v604
        %v607 = vadd.f32 %v562, %v605
        %v608 = vadd.f32 %v563, %v606
        %v609 = vstv %s228
        %v610 = vmul.f32 %v443, %v609
        %v611 = vmul.f32 %v444, %v609
        %v612 = vmul.f32 %v445, %v609
        %v613 = vmul.f32 %v446, %v609
        %v614 = vmul.f32 %v447, %v609
        %v615 = vmul.f32 %v448, %v609
        %v616 = vmul.f32 %v449, %v609
        %v617 = vmul.f32 %v450, %v609
        %v626 = vcombine.low %v610, %v611
        %v627 = vcombine.low %v612, %v613
        %v628 = vcombine.low %v614, %v615
        %v629 = vcombine.low %v616, %v617
        %v631 = vunpack.c.l.s4 1966171168
        %v632 = vunpack.c.0.s8 %v631
        %v633 = vlaneseq
        %v634 = vshrl.u32 %v633, 7
        %v635 = vsub.s32 %v632, %v634
        %v636 = vrot.slane %v626, %v635
        %v638 = vunpack.c.l.s4 1966171168
        %v639 = vunpack.c.0.s8 %v638
        %v640 = vlaneseq
        %v641 = vshrl.u32 %v640, 7
        %v642 = vsub.s32 %v639, %v641
        %v643 = vrot.slane %v627, %v642
        %v645 = vunpack.c.l.s4 1966171168
        %v646 = vunpack.c.0.s8 %v645
        %v647 = vlaneseq
        %v648 = vshrl.u32 %v647, 7
        %v649 = vsub.s32 %v646, %v648
        %v650 = vrot.slane %v628, %v649
        %v652 = vunpack.c.l.s4 1966171168
        %v653 = vunpack.c.0.s8 %v652
        %v654 = vlaneseq
        %v655 = vshrl.u32 %v654, 7
        %v656 = vsub.s32 %v653, %v655
        %v657 = vrot.slane %v629, %v656
        %v658 = vcombine.low %v636, %v643
        %v659 = vcombine.high %v636, %v643
        %v660 = vcombine.low %v650, %v657
        %v661 = vcombine.high %v650, %v657
        %v663 = vunpack.c.l.s4 1966171168
        %v664 = vunpack.c.0.s8 %v663
        %v665 = vlaneseq
        %v666 = vshrl.u32 %v665, 7
        %v667 = vsub.s32 %v664, %v666
        %v668 = vrot.slane %v658, %v667
        %v670 = vunpack.c.l.s4 1966171168
        %v671 = vunpack.c.0.s8 %v670
        %v672 = vlaneseq
        %v673 = vshrl.u32 %v672, 7
        %v674 = vsub.s32 %v671, %v673
        %v675 = vrot.slane %v659, %v674
        %v677 = vunpack.c.l.s4 1966171168
        %v678 = vunpack.c.0.s8 %v677
        %v679 = vlaneseq
        %v680 = vshrl.u32 %v679, 7
        %v681 = vsub.s32 %v678, %v680
        %v682 = vrot.slane %v660, %v681
        %v684 = vunpack.c.l.s4 1966171168
        %v685 = vunpack.c.0.s8 %v684
        %v686 = vlaneseq
        %v687 = vshrl.u32 %v686, 7
        %v688 = vsub.s32 %v685, %v687
        %v689 = vrot.slane %v661, %v688
        %v690 = vcombine.low %v668, %v682
        %v691 = vcombine.low %v675, %v689
        %v694 = vadd.f32 %v587, %v690
        %v695 = vadd.f32 %v588, %v691
        %v696 = vstv %s229
        %v697 = vmul.f32 %v443, %v696
        %v698 = vmul.f32 %v444, %v696
        %v699 = vmul.f32 %v445, %v696
        %v700 = vmul.f32 %v446, %v696
        %v701 = vmul.f32 %v447, %v696
        %v702 = vmul.f32 %v448, %v696
        %v703 = vmul.f32 %v449, %v696
        %v704 = vmul.f32 %v450, %v696
        %v713 = vcombine.low %v697, %v698
        %v714 = vcombine.low %v699, %v700
        %v715 = vcombine.low %v701, %v702
        %v716 = vcombine.low %v703, %v704
        %v718 = vunpack.c.l.s4 1966171168
        %v719 = vunpack.c.0.s8 %v718
        %v720 = vlaneseq
        %v721 = vshrl.u32 %v720, 7
        %v722 = vsub.s32 %v719, %v721
        %v723 = vrot.slane %v713, %v722
        %v725 = vunpack.c.l.s4 1966171168
        %v726 = vunpack.c.0.s8 %v725
        %v727 = vlaneseq
        %v728 = vshrl.u32 %v727, 7
        %v729 = vsub.s32 %v726, %v728
        %v730 = vrot.slane %v714, %v729
        %v732 = vunpack.c.l.s4 1966171168
        %v733 = vunpack.c.0.s8 %v732
        %v734 = vlaneseq
        %v735 = vshrl.u32 %v734, 7
        %v736 = vsub.s32 %v733, %v735
        %v737 = vrot.slane %v715, %v736
        %v739 = vunpack.c.l.s4 1966171168
        %v740 = vunpack.c.0.s8 %v739
        %v741 = vlaneseq
        %v742 = vshrl.u32 %v741, 7
        %v743 = vsub.s32 %v740, %v742
        %v744 = vrot.slane %v716, %v743
        %v745 = vcombine.low %v723, %v730
        %v746 = vcombine.high %v723, %v730
        %v747 = vcombine.low %v737, %v744
        %v748 = vcombine.high %v737, %v744
        %v750 = vunpack.c.l.s4 1966171168
        %v751 = vunpack.c.0.s8 %v750
        %v752 = vlaneseq
        %v753 = vshrl.u32 %v752, 7
        %v754 = vsub.s32 %v751, %v753
        %v755 = vrot.slane %v745, %v754
        %v757 = vunpack.c.l.s4 1966171168
        %v758 = vunpack.c.0.s8 %v757
        %v759 = vlaneseq
        %v760 = vshrl.u32 %v759, 7
        %v761 = vsub.s32 %v758, %v760
        %v762 = vrot.slane %v746, %v761
        %v764 = vunpack.c.l.s4 1966171168
        %v765 = vunpack.c.0.s8 %v764
        %v766 = vlaneseq
        %v767 = vshrl.u32 %v766, 7
        %v768 = vsub.s32 %v765, %v767
        %v769 = vrot.slane %v747, %v768
        %v771 = vunpack.c.l.s4 1966171168
        %v772 = vunpack.c.0.s8 %v771
        %v773 = vlaneseq
        %v774 = vshrl.u32 %v773, 7
        %v775 = vsub.s32 %v772, %v774
        %v776 = vrot.slane %v748, %v775
        %v777 = vcombine.low %v755, %v769
        %v778 = vcombine.low %v762, %v776
        %v781 = vadd.f32 %v592, %v777
        %v782 = vadd.f32 %v593, %v778
        %v783 = vstv %s230
        %v784 = vmul.f32 %v443, %v783
        %v785 = vmul.f32 %v444, %v783
        %v786 = vmul.f32 %v445, %v783
        %v787 = vmul.f32 %v446, %v783
        %v788 = vmul.f32 %v447, %v783
        %v789 = vmul.f32 %v448, %v783
        %v790 = vmul.f32 %v449, %v783
        %v791 = vmul.f32 %v450, %v783
        %v800 = vcombine.low %v784, %v785
        %v801 = vcombine.low %v786, %v787
        %v802 = vcombine.low %v788, %v789
        %v803 = vcombine.low %v790, %v791
        %v805 = vunpack.c.l.s4 1966171168
        %v806 = vunpack.c.0.s8 %v805
        %v807 = vlaneseq
        %v808 = vshrl.u32 %v807, 7
        %v809 = vsub.s32 %v806, %v808
        %v810 = vrot.slane %v800, %v809
        %v812 = vunpack.c.l.s4 1966171168
        %v813 = vunpack.c.0.s8 %v812
        %v814 = vlaneseq
        %v815 = vshrl.u32 %v814, 7
        %v816 = vsub.s32 %v813, %v815
        %v817 = vrot.slane %v801, %v816
        %v819 = vunpack.c.l.s4 1966171168
        %v820 = vunpack.c.0.s8 %v819
        %v821 = vlaneseq
        %v822 = vshrl.u32 %v821, 7
        %v823 = vsub.s32 %v820, %v822
        %v824 = vrot.slane %v802, %v823
        %v826 = vunpack.c.l.s4 1966171168
        %v827 = vunpack.c.0.s8 %v826
        %v828 = vlaneseq
        %v829 = vshrl.u32 %v828, 7
        %v830 = vsub.s32 %v827, %v829
        %v831 = vrot.slane %v803, %v830
        %v832 = vcombine.low %v810, %v817
        %v833 = vcombine.high %v810, %v817
        %v834 = vcombine.low %v824, %v831
        %v835 = vcombine.high %v824, %v831
        %v837 = vunpack.c.l.s4 1966171168
        %v838 = vunpack.c.0.s8 %v837
        %v839 = vlaneseq
        %v840 = vshrl.u32 %v839, 7
        %v841 = vsub.s32 %v838, %v840
        %v842 = vrot.slane %v832, %v841
        %v844 = vunpack.c.l.s4 1966171168
        %v845 = vunpack.c.0.s8 %v844
        %v846 = vlaneseq
        %v847 = vshrl.u32 %v846, 7
        %v848 = vsub.s32 %v845, %v847
        %v849 = vrot.slane %v833, %v848
        %v851 = vunpack.c.l.s4 1966171168
        %v852 = vunpack.c.0.s8 %v851
        %v853 = vlaneseq
        %v854 = vshrl.u32 %v853, 7
        %v855 = vsub.s32 %v852, %v854
        %v856 = vrot.slane %v834, %v855
        %v858 = vunpack.c.l.s4 1966171168
        %v859 = vunpack.c.0.s8 %v858
        %v860 = vlaneseq
        %v861 = vshrl.u32 %v860, 7
        %v862 = vsub.s32 %v859, %v861
        %v863 = vrot.slane %v835, %v862
        %v864 = vcombine.low %v842, %v856
        %v865 = vcombine.low %v849, %v863
        %v868 = vadd.f32 %v597, %v864
        %v869 = vadd.f32 %v598, %v865
        %v870 = vstv %s231
        %v871 = vmul.f32 %v443, %v870
        %v872 = vmul.f32 %v444, %v870
        %v873 = vmul.f32 %v445, %v870
        %v874 = vmul.f32 %v446, %v870
        %v875 = vmul.f32 %v447, %v870
        %v876 = vmul.f32 %v448, %v870
        %v877 = vmul.f32 %v449, %v870
        %v878 = vmul.f32 %v450, %v870
        %v887 = vcombine.low %v871, %v872
        %v888 = vcombine.low %v873, %v874
        %v889 = vcombine.low %v875, %v876
        %v890 = vcombine.low %v877, %v878
        %v892 = vunpack.c.l.s4 1966171168
        %v893 = vunpack.c.0.s8 %v892
        %v894 = vlaneseq
        %v895 = vshrl.u32 %v894, 7
        %v896 = vsub.s32 %v893, %v895
        %v897 = vrot.slane %v887, %v896
        %v899 = vunpack.c.l.s4 1966171168
        %v900 = vunpack.c.0.s8 %v899
        %v901 = vlaneseq
        %v902 = vshrl.u32 %v901, 7
        %v903 = vsub.s32 %v900, %v902
        %v904 = vrot.slane %v888, %v903
        %v906 = vunpack.c.l.s4 1966171168
        %v907 = vunpack.c.0.s8 %v906
        %v908 = vlaneseq
        %v909 = vshrl.u32 %v908, 7
        %v910 = vsub.s32 %v907, %v909
        %v911 = vrot.slane %v889, %v910
        %v913 = vunpack.c.l.s4 1966171168
        %v914 = vunpack.c.0.s8 %v913
        %v915 = vlaneseq
        %v916 = vshrl.u32 %v915, 7
        %v917 = vsub.s32 %v914, %v916
        %v918 = vrot.slane %v890, %v917
        %v919 = vcombine.low %v897, %v904
        %v920 = vcombine.high %v897, %v904
        %v921 = vcombine.low %v911, %v918
        %v922 = vcombine.high %v911, %v918
        %v924 = vunpack.c.l.s4 1966171168
        %v925 = vunpack.c.0.s8 %v924
        %v926 = vlaneseq
        %v927 = vshrl.u32 %v926, 7
        %v928 = vsub.s32 %v925, %v927
        %v929 = vrot.slane %v919, %v928
        %v931 = vunpack.c.l.s4 1966171168
        %v932 = vunpack.c.0.s8 %v931
        %v933 = vlaneseq
        %v934 = vshrl.u32 %v933, 7
        %v935 = vsub.s32 %v932, %v934
        %v936 = vrot.slane %v920, %v935
        %v938 = vunpack.c.l.s4 1966171168
        %v939 = vunpack.c.0.s8 %v938
        %v940 = vlaneseq
        %v941 = vshrl.u32 %v940, 7
        %v942 = vsub.s32 %v939, %v941
        %v943 = vrot.slane %v921, %v942
        %v945 = vunpack.c.l.s4 1966171168
        %v946 = vunpack.c.0.s8 %v945
        %v947 = vlaneseq
        %v948 = vshrl.u32 %v947, 7
        %v949 = vsub.s32 %v946, %v948
        %v950 = vrot.slane %v922, %v949
        %v951 = vcombine.low %v929, %v943
        %v952 = vcombine.low %v936, %v950
        %v955 = vadd.f32 %v602, %v951
        %v956 = vadd.f32 %v603, %v952
        %v957 = vstv %s232
        %v958 = vmul.f32 %v443, %v957
        %v959 = vmul.f32 %v444, %v957
        %v960 = vmul.f32 %v445, %v957
        %v961 = vmul.f32 %v446, %v957
        %v962 = vmul.f32 %v447, %v957
        %v963 = vmul.f32 %v448, %v957
        %v964 = vmul.f32 %v449, %v957
        %v965 = vmul.f32 %v450, %v957
        %v974 = vcombine.low %v958, %v959
        %v975 = vcombine.low %v960, %v961
        %v976 = vcombine.low %v962, %v963
        %v977 = vcombine.low %v964, %v965
        %v979 = vunpack.c.l.s4 1966171168
        %v980 = vunpack.c.0.s8 %v979
        %v981 = vlaneseq
        %v982 = vshrl.u32 %v981, 7
        %v983 = vsub.s32 %v980, %v982
        %v984 = vrot.slane %v974, %v983
        %v986 = vunpack.c.l.s4 1966171168
        %v987 = vunpack.c.0.s8 %v986
        %v988 = vlaneseq
        %v989 = vshrl.u32 %v988, 7
        %v990 = vsub.s32 %v987, %v989
        %v991 = vrot.slane %v975, %v990
        %v993 = vunpack.c.l.s4 1966171168
        %v994 = vunpack.c.0.s8 %v993
        %v995 = vlaneseq
        %v996 = vshrl.u32 %v995, 7
        %v997 = vsub.s32 %v994, %v996
        %v998 = vrot.slane %v976, %v997
        %v1000 = vunpack.c.l.s4 1966171168
        %v1001 = vunpack.c.0.s8 %v1000
        %v1002 = vlaneseq
        %v1003 = vshrl.u32 %v1002, 7
        %v1004 = vsub.s32 %v1001, %v1003
        %v1005 = vrot.slane %v977, %v1004
        %v1006 = vcombine.low %v984, %v991
        %v1007 = vcombine.high %v984, %v991
        %v1008 = vcombine.low %v998, %v1005
        %v1009 = vcombine.high %v998, %v1005
        %v1011 = vunpack.c.l.s4 1966171168
        %v1012 = vunpack.c.0.s8 %v1011
        %v1013 = vlaneseq
        %v1014 = vshrl.u32 %v1013, 7
        %v1015 = vsub.s32 %v1012, %v1014
        %v1016 = vrot.slane %v1006, %v1015
        %v1018 = vunpack.c.l.s4 1966171168
        %v1019 = vunpack.c.0.s8 %v1018
        %v1020 = vlaneseq
        %v1021 = vshrl.u32 %v1020, 7
        %v1022 = vsub.s32 %v1019, %v1021
        %v1023 = vrot.slane %v1007, %v1022
        %v1025 = vunpack.c.l.s4 1966171168
        %v1026 = vunpack.c.0.s8 %v1025
        %v1027 = vlaneseq
        %v1028 = vshrl.u32 %v1027, 7
        %v1029 = vsub.s32 %v1026, %v1028
        %v1030 = vrot.slane %v1008, %v1029
        %v1032 = vunpack.c.l.s4 1966171168
        %v1033 = vunpack.c.0.s8 %v1032
        %v1034 = vlaneseq
        %v1035 = vshrl.u32 %v1034, 7
        %v1036 = vsub.s32 %v1033, %v1035
        %v1037 = vrot.slane %v1009, %v1036
        %v1038 = vcombine.low %v1016, %v1030
        %v1039 = vcombine.low %v1023, %v1037
        %v1042 = vadd.f32 %v607, %v1038
        %v1043 = vadd.f32 %v608, %v1039
        %1044 = vrot.lane.b32.xlu0 %v523, 112
        %v1045 = vpop.permute.xlu0 %1044
        %1046 = vrot.lane.b32.xlu0 %v524, 112
        %v1047 = vpop.permute.xlu0 %1046
        %vm1048 = vcmp.lt.s32.totalorder %v532, 112
        %v1049 = vsel %vm1048, %v1045, %v1047
        %v1050 = vsel %vm1048, %v1047, %v1045
        %v1052 = vlaneseq
        %v1053 = vshrl.u32 %v1052, 7
        %v1054 = vsub.s32 0, %v1053
        %v1055 = vrot.slane %v301, %v1054
        %v1056 = vlaneseq
        %v1057 = vshrl.u32 %v1056, 7
        %v1058 = vsub.s32 1, %v1057
        %v1059 = vrot.slane %v301, %v1058
        %v1062 = vmul.f32 %v1049, %v1055
        %v1063 = vmul.f32 %v1050, %v1059
        %v1064 = vstv %s233
        %v1065 = vmul.f32 %v1062, %v1064
        %v1066 = vmul.f32 %v1063, %v1064
        %v1067 = vadd.f32 %v694, %v1065
        %v1068 = vadd.f32 %v695, %v1066
        %v1069 = vstv %s234
        %v1070 = vmul.f32 %v1062, %v1069
        %v1071 = vmul.f32 %v1063, %v1069
        %v1072 = vadd.f32 %v781, %v1070
        %v1073 = vadd.f32 %v782, %v1071
        %v1074 = vstv %s235
        %v1075 = vmul.f32 %v1062, %v1074
        %v1076 = vmul.f32 %v1063, %v1074
        %v1077 = vadd.f32 %v868, %v1075
        %v1078 = vadd.f32 %v869, %v1076
        %v1079 = vstv %s236
        %v1080 = vmul.f32 %v1062, %v1079
        %v1081 = vmul.f32 %v1063, %v1079
        %v1082 = vadd.f32 %v955, %v1080
        %v1083 = vadd.f32 %v956, %v1081
        %v1084 = vstv %s237
        %v1085 = vmul.f32 %v1062, %v1084
        %v1086 = vmul.f32 %v1063, %v1084
        %v1087 = vadd.f32 %v1042, %v1085
        %v1088 = vadd.f32 %v1043, %v1086
        %1089 = vrot.lane.b32.xlu0 %v523, 96
        %v1090 = vpop.permute.xlu0 %1089
        %1091 = vrot.lane.b32.xlu0 %v524, 96
        %v1092 = vpop.permute.xlu0 %1091
        %vm1093 = vcmp.lt.s32.totalorder %v532, 96
        %v1094 = vsel %vm1093, %v1090, %v1092
        %v1095 = vsel %vm1093, %v1092, %v1090
        %v1097 = vlaneseq
        %v1098 = vshrl.u32 %v1097, 7
        %v1099 = vsub.s32 0, %v1098
        %v1100 = vrot.slane %v305, %v1099
        %v1101 = vlaneseq
        %v1102 = vshrl.u32 %v1101, 7
        %v1103 = vsub.s32 1, %v1102
        %v1104 = vrot.slane %v305, %v1103
        %v1107 = vmul.f32 %v1094, %v1100
        %v1108 = vmul.f32 %v1095, %v1104
        %v1109 = vstv %s238
        %v1110 = vmul.f32 %v1107, %v1109
        %v1111 = vmul.f32 %v1108, %v1109
        %v1112 = vadd.f32 %v1067, %v1110
        %v1113 = vadd.f32 %v1068, %v1111
        %v1114 = vstv %s239
        %v1115 = vmul.f32 %v1107, %v1114
        %v1116 = vmul.f32 %v1108, %v1114
        %v1117 = vadd.f32 %v1072, %v1115
        %v1118 = vadd.f32 %v1073, %v1116
        %v1119 = vstv %s240
        %v1120 = vmul.f32 %v1107, %v1119
        %v1121 = vmul.f32 %v1108, %v1119
        %v1122 = vadd.f32 %v1077, %v1120
        %v1123 = vadd.f32 %v1078, %v1121
        %v1124 = vstv %s241
        %v1125 = vmul.f32 %v1107, %v1124
        %v1126 = vmul.f32 %v1108, %v1124
        %v1127 = vadd.f32 %v1082, %v1125
        %v1128 = vadd.f32 %v1083, %v1126
        %v1129 = vstv %s242
        %v1130 = vmul.f32 %v1107, %v1129
        %v1131 = vmul.f32 %v1108, %v1129
        %v1132 = vadd.f32 %v1087, %v1130
        %v1133 = vadd.f32 %v1088, %v1131
        %v1142 = vcombine.low %v427, %v428
        %v1143 = vcombine.low %v429, %v430
        %v1144 = vcombine.low %v431, %v432
        %v1145 = vcombine.low %v433, %v434
        %v1147 = vunpack.c.l.s4 1966171168
        %v1148 = vunpack.c.0.s8 %v1147
        %v1149 = vlaneseq
        %v1150 = vshrl.u32 %v1149, 7
        %v1151 = vsub.s32 %v1148, %v1150
        %v1152 = vrot.slane %v1142, %v1151
        %v1154 = vunpack.c.l.s4 1966171168
        %v1155 = vunpack.c.0.s8 %v1154
        %v1156 = vlaneseq
        %v1157 = vshrl.u32 %v1156, 7
        %v1158 = vsub.s32 %v1155, %v1157
        %v1159 = vrot.slane %v1143, %v1158
        %v1161 = vunpack.c.l.s4 1966171168
        %v1162 = vunpack.c.0.s8 %v1161
        %v1163 = vlaneseq
        %v1164 = vshrl.u32 %v1163, 7
        %v1165 = vsub.s32 %v1162, %v1164
        %v1166 = vrot.slane %v1144, %v1165
        %v1168 = vunpack.c.l.s4 1966171168
        %v1169 = vunpack.c.0.s8 %v1168
        %v1170 = vlaneseq
        %v1171 = vshrl.u32 %v1170, 7
        %v1172 = vsub.s32 %v1169, %v1171
        %v1173 = vrot.slane %v1145, %v1172
        %v1174 = vcombine.low %v1152, %v1159
        %v1175 = vcombine.high %v1152, %v1159
        %v1176 = vcombine.low %v1166, %v1173
        %v1177 = vcombine.high %v1166, %v1173
        %v1179 = vunpack.c.l.s4 1966171168
        %v1180 = vunpack.c.0.s8 %v1179
        %v1181 = vlaneseq
        %v1182 = vshrl.u32 %v1181, 7
        %v1183 = vsub.s32 %v1180, %v1182
        %v1184 = vrot.slane %v1174, %v1183
        %v1186 = vunpack.c.l.s4 1966171168
        %v1187 = vunpack.c.0.s8 %v1186
        %v1188 = vlaneseq
        %v1189 = vshrl.u32 %v1188, 7
        %v1190 = vsub.s32 %v1187, %v1189
        %v1191 = vrot.slane %v1175, %v1190
        %v1193 = vunpack.c.l.s4 1966171168
        %v1194 = vunpack.c.0.s8 %v1193
        %v1195 = vlaneseq
        %v1196 = vshrl.u32 %v1195, 7
        %v1197 = vsub.s32 %v1194, %v1196
        %v1198 = vrot.slane %v1176, %v1197
        %v1200 = vunpack.c.l.s4 1966171168
        %v1201 = vunpack.c.0.s8 %v1200
        %v1202 = vlaneseq
        %v1203 = vshrl.u32 %v1202, 7
        %v1204 = vsub.s32 %v1201, %v1203
        %v1205 = vrot.slane %v1177, %v1204
        %v1206 = vcombine.low %v1184, %v1198
        %v1207 = vcombine.low %v1191, %v1205
        %1210 = vrot.lane.b32.xlu0 %v1206, 32
        %v1211 = vpop.permute.xlu0 %1210
        %1212 = vrot.lane.b32.xlu0 %v1207, 32
        %v1213 = vpop.permute.xlu0 %1212
        %v1214 = vsel %vm533, %v1211, %v1213
        %v1215 = vsel %vm533, %v1213, %v1211
        %v1216 = vmul.f32 %v1215, %v540
        %v1217 = vmul.f32 %v1214, %v544
        %v1218 = vstv %s243
        %v1219 = vmul.f32 %v1216, %v1218
        %v1220 = vmul.f32 %v1217, %v1218
        %v1221 = vadd.f32 %v1112, %v1219
        %v1222 = vadd.f32 %v1113, %v1220
        %v1223 = vstv %s244
        %v1224 = vmul.f32 %v1216, %v1223
        %v1225 = vmul.f32 %v1217, %v1223
        %v1226 = vadd.f32 %v1117, %v1224
        %v1227 = vadd.f32 %v1118, %v1225
        %v1228 = vstv %s245
        %v1229 = vmul.f32 %v1216, %v1228
        %v1230 = vmul.f32 %v1217, %v1228
        %v1231 = vadd.f32 %v1122, %v1229
        %v1232 = vadd.f32 %v1123, %v1230
        %v1233 = vstv %s246
        %v1234 = vmul.f32 %v1216, %v1233
        %v1235 = vmul.f32 %v1217, %v1233
        %v1236 = vadd.f32 %v1127, %v1234
        %v1237 = vadd.f32 %v1128, %v1235
        %v1238 = vstv %s247
        %v1239 = vmul.f32 %v1216, %v1238
        %v1240 = vmul.f32 %v1217, %v1238
        %v1241 = vadd.f32 %v1132, %v1239
        %v1242 = vadd.f32 %v1133, %v1240
        %1243 = vrot.lane.b32.xlu0 %v1206, 16
        %v1244 = vpop.permute.xlu0 %1243
        %1245 = vrot.lane.b32.xlu0 %v1207, 16
        %v1246 = vpop.permute.xlu0 %1245
        %v1247 = vsel %vm568, %v1244, %v1246
        %v1248 = vsel %vm568, %v1246, %v1244
        %v1249 = vmul.f32 %v1248, %v575
        %v1250 = vmul.f32 %v1247, %v579
        %v1251 = vstv %s248
        %v1252 = vmul.f32 %v1249, %v1251
        %v1253 = vmul.f32 %v1250, %v1251
        %v1254 = vadd.f32 %v1221, %v1252
        %v1255 = vadd.f32 %v1222, %v1253
        %v1256 = vstv %s249
        %v1257 = vmul.f32 %v1249, %v1256
        %v1258 = vmul.f32 %v1250, %v1256
        %v1259 = vadd.f32 %v1226, %v1257
        %v1260 = vadd.f32 %v1227, %v1258
        %v1261 = vstv %s250
        %v1262 = vmul.f32 %v1249, %v1261
        %v1263 = vmul.f32 %v1250, %v1261
        %v1264 = vadd.f32 %v1231, %v1262
        %v1265 = vadd.f32 %v1232, %v1263
        %v1266 = vstv %s251
        %v1267 = vmul.f32 %v1249, %v1266
        %v1268 = vmul.f32 %v1250, %v1266
        %v1269 = vadd.f32 %v1236, %v1267
        %v1270 = vadd.f32 %v1237, %v1268
        %v1271 = vstv %s252
        %v1272 = vmul.f32 %v1249, %v1271
        %v1273 = vmul.f32 %v1250, %v1271
        %v1274 = vadd.f32 %v1241, %v1272
        %v1275 = vadd.f32 %v1242, %v1273
        %v1276 = vstv %s253
        %v1277 = vmul.f32 %v427, %v1276
        %v1278 = vmul.f32 %v428, %v1276
        %v1279 = vmul.f32 %v429, %v1276
        %v1280 = vmul.f32 %v430, %v1276
        %v1281 = vmul.f32 %v431, %v1276
        %v1282 = vmul.f32 %v432, %v1276
        %v1283 = vmul.f32 %v433, %v1276
        %v1284 = vmul.f32 %v434, %v1276
        %v1293 = vcombine.low %v1277, %v1278
        %v1294 = vcombine.low %v1279, %v1280
        %v1295 = vcombine.low %v1281, %v1282
        %v1296 = vcombine.low %v1283, %v1284
        %v1298 = vunpack.c.l.s4 1966171168
        %v1299 = vunpack.c.0.s8 %v1298
        %v1300 = vlaneseq
        %v1301 = vshrl.u32 %v1300, 7
        %v1302 = vsub.s32 %v1299, %v1301
        %v1303 = vrot.slane %v1293, %v1302
        %v1305 = vunpack.c.l.s4 1966171168
        %v1306 = vunpack.c.0.s8 %v1305
        %v1307 = vlaneseq
        %v1308 = vshrl.u32 %v1307, 7
        %v1309 = vsub.s32 %v1306, %v1308
        %v1310 = vrot.slane %v1294, %v1309
        %v1312 = vunpack.c.l.s4 1966171168
        %v1313 = vunpack.c.0.s8 %v1312
        %v1314 = vlaneseq
        %v1315 = vshrl.u32 %v1314, 7
        %v1316 = vsub.s32 %v1313, %v1315
        %v1317 = vrot.slane %v1295, %v1316
        %v1319 = vunpack.c.l.s4 1966171168
        %v1320 = vunpack.c.0.s8 %v1319
        %v1321 = vlaneseq
        %v1322 = vshrl.u32 %v1321, 7
        %v1323 = vsub.s32 %v1320, %v1322
        %v1324 = vrot.slane %v1296, %v1323
        %v1325 = vcombine.low %v1303, %v1310
        %v1326 = vcombine.high %v1303, %v1310
        %v1327 = vcombine.low %v1317, %v1324
        %v1328 = vcombine.high %v1317, %v1324
        %v1330 = vunpack.c.l.s4 1966171168
        %v1331 = vunpack.c.0.s8 %v1330
        %v1332 = vlaneseq
        %v1333 = vshrl.u32 %v1332, 7
        %v1334 = vsub.s32 %v1331, %v1333
        %v1335 = vrot.slane %v1325, %v1334
        %v1337 = vunpack.c.l.s4 1966171168
        %v1338 = vunpack.c.0.s8 %v1337
        %v1339 = vlaneseq
        %v1340 = vshrl.u32 %v1339, 7
        %v1341 = vsub.s32 %v1338, %v1340
        %v1342 = vrot.slane %v1326, %v1341
        %v1344 = vunpack.c.l.s4 1966171168
        %v1345 = vunpack.c.0.s8 %v1344
        %v1346 = vlaneseq
        %v1347 = vshrl.u32 %v1346, 7
        %v1348 = vsub.s32 %v1345, %v1347
        %v1349 = vrot.slane %v1327, %v1348
        %v1351 = vunpack.c.l.s4 1966171168
        %v1352 = vunpack.c.0.s8 %v1351
        %v1353 = vlaneseq
        %v1354 = vshrl.u32 %v1353, 7
        %v1355 = vsub.s32 %v1352, %v1354
        %v1356 = vrot.slane %v1328, %v1355
        %v1357 = vcombine.low %v1335, %v1349
        %v1358 = vcombine.low %v1342, %v1356
        %v1361 = vadd.f32 %v1254, %v1357
        %v1362 = vadd.f32 %v1255, %v1358
        %v1363 = vstv %s254
        %v1364 = vmul.f32 %v427, %v1363
        %v1365 = vmul.f32 %v428, %v1363
        %v1366 = vmul.f32 %v429, %v1363
        %v1367 = vmul.f32 %v430, %v1363
        %v1368 = vmul.f32 %v431, %v1363
        %v1369 = vmul.f32 %v432, %v1363
        %v1370 = vmul.f32 %v433, %v1363
        %v1371 = vmul.f32 %v434, %v1363
        %v1380 = vcombine.low %v1364, %v1365
        %v1381 = vcombine.low %v1366, %v1367
        %v1382 = vcombine.low %v1368, %v1369
        %v1383 = vcombine.low %v1370, %v1371
        %v1385 = vunpack.c.l.s4 1966171168
        %v1386 = vunpack.c.0.s8 %v1385
        %v1387 = vlaneseq
        %v1388 = vshrl.u32 %v1387, 7
        %v1389 = vsub.s32 %v1386, %v1388
        %v1390 = vrot.slane %v1380, %v1389
        %v1392 = vunpack.c.l.s4 1966171168
        %v1393 = vunpack.c.0.s8 %v1392
        %v1394 = vlaneseq
        %v1395 = vshrl.u32 %v1394, 7
        %v1396 = vsub.s32 %v1393, %v1395
        %v1397 = vrot.slane %v1381, %v1396
        %v1399 = vunpack.c.l.s4 1966171168
        %v1400 = vunpack.c.0.s8 %v1399
        %v1401 = vlaneseq
        %v1402 = vshrl.u32 %v1401, 7
        %v1403 = vsub.s32 %v1400, %v1402
        %v1404 = vrot.slane %v1382, %v1403
        %v1406 = vunpack.c.l.s4 1966171168
        %v1407 = vunpack.c.0.s8 %v1406
        %v1408 = vlaneseq
        %v1409 = vshrl.u32 %v1408, 7
        %v1410 = vsub.s32 %v1407, %v1409
        %v1411 = vrot.slane %v1383, %v1410
        %v1412 = vcombine.low %v1390, %v1397
        %v1413 = vcombine.high %v1390, %v1397
        %v1414 = vcombine.low %v1404, %v1411
        %v1415 = vcombine.high %v1404, %v1411
        %v1417 = vunpack.c.l.s4 1966171168
        %v1418 = vunpack.c.0.s8 %v1417
        %v1419 = vlaneseq
        %v1420 = vshrl.u32 %v1419, 7
        %v1421 = vsub.s32 %v1418, %v1420
        %v1422 = vrot.slane %v1412, %v1421
        %v1424 = vunpack.c.l.s4 1966171168
        %v1425 = vunpack.c.0.s8 %v1424
        %v1426 = vlaneseq
        %v1427 = vshrl.u32 %v1426, 7
        %v1428 = vsub.s32 %v1425, %v1427
        %v1429 = vrot.slane %v1413, %v1428
        %v1431 = vunpack.c.l.s4 1966171168
        %v1432 = vunpack.c.0.s8 %v1431
        %v1433 = vlaneseq
        %v1434 = vshrl.u32 %v1433, 7
        %v1435 = vsub.s32 %v1432, %v1434
        %v1436 = vrot.slane %v1414, %v1435
        %v1438 = vunpack.c.l.s4 1966171168
        %v1439 = vunpack.c.0.s8 %v1438
        %v1440 = vlaneseq
        %v1441 = vshrl.u32 %v1440, 7
        %v1442 = vsub.s32 %v1439, %v1441
        %v1443 = vrot.slane %v1415, %v1442
        %v1444 = vcombine.low %v1422, %v1436
        %v1445 = vcombine.low %v1429, %v1443
        %v1448 = vadd.f32 %v1259, %v1444
        %v1449 = vadd.f32 %v1260, %v1445
        %v1450 = vstv %s255
        %v1451 = vmul.f32 %v427, %v1450
        %v1452 = vmul.f32 %v428, %v1450
        %v1453 = vmul.f32 %v429, %v1450
        %v1454 = vmul.f32 %v430, %v1450
        %v1455 = vmul.f32 %v431, %v1450
        %v1456 = vmul.f32 %v432, %v1450
        %v1457 = vmul.f32 %v433, %v1450
        %v1458 = vmul.f32 %v434, %v1450
        %v1467 = vcombine.low %v1451, %v1452
        %v1468 = vcombine.low %v1453, %v1454
        %v1469 = vcombine.low %v1455, %v1456
        %v1470 = vcombine.low %v1457, %v1458
        %v1472 = vunpack.c.l.s4 1966171168
        %v1473 = vunpack.c.0.s8 %v1472
        %v1474 = vlaneseq
        %v1475 = vshrl.u32 %v1474, 7
        %v1476 = vsub.s32 %v1473, %v1475
        %v1477 = vrot.slane %v1467, %v1476
        %v1479 = vunpack.c.l.s4 1966171168
        %v1480 = vunpack.c.0.s8 %v1479
        %v1481 = vlaneseq
        %v1482 = vshrl.u32 %v1481, 7
        %v1483 = vsub.s32 %v1480, %v1482
        %v1484 = vrot.slane %v1468, %v1483
        %v1486 = vunpack.c.l.s4 1966171168
        %v1487 = vunpack.c.0.s8 %v1486
        %v1488 = vlaneseq
        %v1489 = vshrl.u32 %v1488, 7
        %v1490 = vsub.s32 %v1487, %v1489
        %v1491 = vrot.slane %v1469, %v1490
        %v1493 = vunpack.c.l.s4 1966171168
        %v1494 = vunpack.c.0.s8 %v1493
        %v1495 = vlaneseq
        %v1496 = vshrl.u32 %v1495, 7
        %v1497 = vsub.s32 %v1494, %v1496
        %v1498 = vrot.slane %v1470, %v1497
        %v1499 = vcombine.low %v1477, %v1484
        %v1500 = vcombine.high %v1477, %v1484
        %v1501 = vcombine.low %v1491, %v1498
        %v1502 = vcombine.high %v1491, %v1498
        %v1504 = vunpack.c.l.s4 1966171168
        %v1505 = vunpack.c.0.s8 %v1504
        %v1506 = vlaneseq
        %v1507 = vshrl.u32 %v1506, 7
        %v1508 = vsub.s32 %v1505, %v1507
        %v1509 = vrot.slane %v1499, %v1508
        %v1511 = vunpack.c.l.s4 1966171168
        %v1512 = vunpack.c.0.s8 %v1511
        %v1513 = vlaneseq
        %v1514 = vshrl.u32 %v1513, 7
        %v1515 = vsub.s32 %v1512, %v1514
        %v1516 = vrot.slane %v1500, %v1515
        %v1518 = vunpack.c.l.s4 1966171168
        %v1519 = vunpack.c.0.s8 %v1518
        %v1520 = vlaneseq
        %v1521 = vshrl.u32 %v1520, 7
        %v1522 = vsub.s32 %v1519, %v1521
        %v1523 = vrot.slane %v1501, %v1522
        %v1525 = vunpack.c.l.s4 1966171168
        %v1526 = vunpack.c.0.s8 %v1525
        %v1527 = vlaneseq
        %v1528 = vshrl.u32 %v1527, 7
        %v1529 = vsub.s32 %v1526, %v1528
        %v1530 = vrot.slane %v1502, %v1529
        %v1531 = vcombine.low %v1509, %v1523
        %v1532 = vcombine.low %v1516, %v1530
        %v1535 = vadd.f32 %v1264, %v1531
        %v1536 = vadd.f32 %v1265, %v1532
        %v1537 = vstv %s256
        %v1538 = vmul.f32 %v427, %v1537
        %v1539 = vmul.f32 %v428, %v1537
        %v1540 = vmul.f32 %v429, %v1537
        %v1541 = vmul.f32 %v430, %v1537
        %v1542 = vmul.f32 %v431, %v1537
        %v1543 = vmul.f32 %v432, %v1537
        %v1544 = vmul.f32 %v433, %v1537
        %v1545 = vmul.f32 %v434, %v1537
        %v1554 = vcombine.low %v1538, %v1539
        %v1555 = vcombine.low %v1540, %v1541
        %v1556 = vcombine.low %v1542, %v1543
        %v1557 = vcombine.low %v1544, %v1545
        %v1559 = vunpack.c.l.s4 1966171168
        %v1560 = vunpack.c.0.s8 %v1559
        %v1561 = vlaneseq
        %v1562 = vshrl.u32 %v1561, 7
        %v1563 = vsub.s32 %v1560, %v1562
        %v1564 = vrot.slane %v1554, %v1563
        %v1566 = vunpack.c.l.s4 1966171168
        %v1567 = vunpack.c.0.s8 %v1566
        %v1568 = vlaneseq
        %v1569 = vshrl.u32 %v1568, 7
        %v1570 = vsub.s32 %v1567, %v1569
        %v1571 = vrot.slane %v1555, %v1570
        %v1573 = vunpack.c.l.s4 1966171168
        %v1574 = vunpack.c.0.s8 %v1573
        %v1575 = vlaneseq
        %v1576 = vshrl.u32 %v1575, 7
        %v1577 = vsub.s32 %v1574, %v1576
        %v1578 = vrot.slane %v1556, %v1577
        %v1580 = vunpack.c.l.s4 1966171168
        %v1581 = vunpack.c.0.s8 %v1580
        %v1582 = vlaneseq
        %v1583 = vshrl.u32 %v1582, 7
        %v1584 = vsub.s32 %v1581, %v1583
        %v1585 = vrot.slane %v1557, %v1584
        %v1586 = vcombine.low %v1564, %v1571
        %v1587 = vcombine.high %v1564, %v1571
        %v1588 = vcombine.low %v1578, %v1585
        %v1589 = vcombine.high %v1578, %v1585
        %v1591 = vunpack.c.l.s4 1966171168
        %v1592 = vunpack.c.0.s8 %v1591
        %v1593 = vlaneseq
        %v1594 = vshrl.u32 %v1593, 7
        %v1595 = vsub.s32 %v1592, %v1594
        %v1596 = vrot.slane %v1586, %v1595
        %v1598 = vunpack.c.l.s4 1966171168
        %v1599 = vunpack.c.0.s8 %v1598
        %v1600 = vlaneseq
        %v1601 = vshrl.u32 %v1600, 7
        %v1602 = vsub.s32 %v1599, %v1601
        %v1603 = vrot.slane %v1587, %v1602
        %v1605 = vunpack.c.l.s4 1966171168
        %v1606 = vunpack.c.0.s8 %v1605
        %v1607 = vlaneseq
        %v1608 = vshrl.u32 %v1607, 7
        %v1609 = vsub.s32 %v1606, %v1608
        %v1610 = vrot.slane %v1588, %v1609
        %v1612 = vunpack.c.l.s4 1966171168
        %v1613 = vunpack.c.0.s8 %v1612
        %v1614 = vlaneseq
        %v1615 = vshrl.u32 %v1614, 7
        %v1616 = vsub.s32 %v1613, %v1615
        %v1617 = vrot.slane %v1589, %v1616
        %v1618 = vcombine.low %v1596, %v1610
        %v1619 = vcombine.low %v1603, %v1617
        %v1622 = vadd.f32 %v1269, %v1618
        %v1623 = vadd.f32 %v1270, %v1619
        %v1624 = vstv %s257
        %v1625 = vmul.f32 %v427, %v1624
        %v1626 = vmul.f32 %v428, %v1624
        %v1627 = vmul.f32 %v429, %v1624
        %v1628 = vmul.f32 %v430, %v1624
        %v1629 = vmul.f32 %v431, %v1624
        %v1630 = vmul.f32 %v432, %v1624
        %v1631 = vmul.f32 %v433, %v1624
        %v1632 = vmul.f32 %v434, %v1624
        %v1641 = vcombine.low %v1625, %v1626
        %v1642 = vcombine.low %v1627, %v1628
        %v1643 = vcombine.low %v1629, %v1630
        %v1644 = vcombine.low %v1631, %v1632
        %v1646 = vunpack.c.l.s4 1966171168
        %v1647 = vunpack.c.0.s8 %v1646
        %v1648 = vlaneseq
        %v1649 = vshrl.u32 %v1648, 7
        %v1650 = vsub.s32 %v1647, %v1649
        %v1651 = vrot.slane %v1641, %v1650
        %v1653 = vunpack.c.l.s4 1966171168
        %v1654 = vunpack.c.0.s8 %v1653
        %v1655 = vlaneseq
        %v1656 = vshrl.u32 %v1655, 7
        %v1657 = vsub.s32 %v1654, %v1656
        %v1658 = vrot.slane %v1642, %v1657
        %v1660 = vunpack.c.l.s4 1966171168
        %v1661 = vunpack.c.0.s8 %v1660
        %v1662 = vlaneseq
        %v1663 = vshrl.u32 %v1662, 7
        %v1664 = vsub.s32 %v1661, %v1663
        %v1665 = vrot.slane %v1643, %v1664
        %v1667 = vunpack.c.l.s4 1966171168
        %v1668 = vunpack.c.0.s8 %v1667
        %v1669 = vlaneseq
        %v1670 = vshrl.u32 %v1669, 7
        %v1671 = vsub.s32 %v1668, %v1670
        %v1672 = vrot.slane %v1644, %v1671
        %v1673 = vcombine.low %v1651, %v1658
        %v1674 = vcombine.high %v1651, %v1658
        %v1675 = vcombine.low %v1665, %v1672
        %v1676 = vcombine.high %v1665, %v1672
        %v1678 = vunpack.c.l.s4 1966171168
        %v1679 = vunpack.c.0.s8 %v1678
        %v1680 = vlaneseq
        %v1681 = vshrl.u32 %v1680, 7
        %v1682 = vsub.s32 %v1679, %v1681
        %v1683 = vrot.slane %v1673, %v1682
        %v1685 = vunpack.c.l.s4 1966171168
        %v1686 = vunpack.c.0.s8 %v1685
        %v1687 = vlaneseq
        %v1688 = vshrl.u32 %v1687, 7
        %v1689 = vsub.s32 %v1686, %v1688
        %v1690 = vrot.slane %v1674, %v1689
        %v1692 = vunpack.c.l.s4 1966171168
        %v1693 = vunpack.c.0.s8 %v1692
        %v1694 = vlaneseq
        %v1695 = vshrl.u32 %v1694, 7
        %v1696 = vsub.s32 %v1693, %v1695
        %v1697 = vrot.slane %v1675, %v1696
        %v1699 = vunpack.c.l.s4 1966171168
        %v1700 = vunpack.c.0.s8 %v1699
        %v1701 = vlaneseq
        %v1702 = vshrl.u32 %v1701, 7
        %v1703 = vsub.s32 %v1700, %v1702
        %v1704 = vrot.slane %v1676, %v1703
        %v1705 = vcombine.low %v1683, %v1697
        %v1706 = vcombine.low %v1690, %v1704
        %v1709 = vadd.f32 %v1274, %v1705
        %v1710 = vadd.f32 %v1275, %v1706
        %1711 = vrot.lane.b32.xlu0 %v1206, 112
        %v1712 = vpop.permute.xlu0 %1711
        %1713 = vrot.lane.b32.xlu0 %v1207, 112
        %v1714 = vpop.permute.xlu0 %1713
        %v1715 = vsel %vm1048, %v1712, %v1714
        %v1716 = vsel %vm1048, %v1714, %v1712
        %v1717 = vmul.f32 %v1715, %v1055
        %v1718 = vmul.f32 %v1716, %v1059
        %v1719 = vstv %s258
        %v1720 = vmul.f32 %v1717, %v1719
        %v1721 = vmul.f32 %v1718, %v1719
        %v1722 = vadd.f32 %v1361, %v1720
        %v1723 = vadd.f32 %v1362, %v1721
        %v1724 = vstv %s259
        %v1725 = vmul.f32 %v1717, %v1724
        %v1726 = vmul.f32 %v1718, %v1724
        %v1727 = vadd.f32 %v1448, %v1725
        %v1728 = vadd.f32 %v1449, %v1726
        %v1729 = vstv %s260
        %v1730 = vmul.f32 %v1717, %v1729
        %v1731 = vmul.f32 %v1718, %v1729
        %v1732 = vadd.f32 %v1535, %v1730
        %v1733 = vadd.f32 %v1536, %v1731
        %v1734 = vstv %s261
        %v1735 = vmul.f32 %v1717, %v1734
        %v1736 = vmul.f32 %v1718, %v1734
        %v1737 = vadd.f32 %v1622, %v1735
        %v1738 = vadd.f32 %v1623, %v1736
        %v1739 = vstv %s262
        %v1740 = vmul.f32 %v1717, %v1739
        %v1741 = vmul.f32 %v1718, %v1739
        %v1742 = vadd.f32 %v1709, %v1740
        %v1743 = vadd.f32 %v1710, %v1741
        %1744 = vrot.lane.b32.xlu0 %v1206, 96
        %v1745 = vpop.permute.xlu0 %1744
        %1746 = vrot.lane.b32.xlu0 %v1207, 96
        %v1747 = vpop.permute.xlu0 %1746
        %v1748 = vsel %vm1093, %v1745, %v1747
        %v1749 = vsel %vm1093, %v1747, %v1745
        %v1750 = vmul.f32 %v1748, %v1100
        %v1751 = vmul.f32 %v1749, %v1104
        %v1752 = vstv %s263
        %v1753 = vmul.f32 %v1750, %v1752
        %v1754 = vmul.f32 %v1751, %v1752
        %v1755 = vadd.f32 %v1722, %v1753
        %v1756 = vadd.f32 %v1723, %v1754
        %v1757 = vstv %s264
        %v1758 = vmul.f32 %v1750, %v1757
        %v1759 = vmul.f32 %v1751, %v1757
        %v1760 = vadd.f32 %v1727, %v1758
        %v1761 = vadd.f32 %v1728, %v1759
        %v1762 = vstv %s265
        %v1763 = vmul.f32 %v1750, %v1762
        %v1764 = vmul.f32 %v1751, %v1762
        %v1765 = vadd.f32 %v1732, %v1763
        %v1766 = vadd.f32 %v1733, %v1764
        %v1767 = vstv %s266
        %v1768 = vmul.f32 %v1750, %v1767
        %v1769 = vmul.f32 %v1751, %v1767
        %v1770 = vadd.f32 %v1737, %v1768
        %v1771 = vadd.f32 %v1738, %v1769
        %v1772 = vstv %s267
        %v1773 = vmul.f32 %v1750, %v1772
        %v1774 = vmul.f32 %v1751, %v1772
        %v1775 = vadd.f32 %v1742, %v1773
        %v1776 = vadd.f32 %v1743, %v1774
        %v1785 = vcombine.low %v435, %v436
        %v1786 = vcombine.low %v437, %v438
        %v1787 = vcombine.low %v439, %v440
        %v1788 = vcombine.low %v441, %v442
        %v1790 = vunpack.c.l.s4 1966171168
        %v1791 = vunpack.c.0.s8 %v1790
        %v1792 = vlaneseq
        %v1793 = vshrl.u32 %v1792, 7
        %v1794 = vsub.s32 %v1791, %v1793
        %v1795 = vrot.slane %v1785, %v1794
        %v1797 = vunpack.c.l.s4 1966171168
        %v1798 = vunpack.c.0.s8 %v1797
        %v1799 = vlaneseq
        %v1800 = vshrl.u32 %v1799, 7
        %v1801 = vsub.s32 %v1798, %v1800
        %v1802 = vrot.slane %v1786, %v1801
        %v1804 = vunpack.c.l.s4 1966171168
        %v1805 = vunpack.c.0.s8 %v1804
        %v1806 = vlaneseq
        %v1807 = vshrl.u32 %v1806, 7
        %v1808 = vsub.s32 %v1805, %v1807
        %v1809 = vrot.slane %v1787, %v1808
        %v1811 = vunpack.c.l.s4 1966171168
        %v1812 = vunpack.c.0.s8 %v1811
        %v1813 = vlaneseq
        %v1814 = vshrl.u32 %v1813, 7
        %v1815 = vsub.s32 %v1812, %v1814
        %v1816 = vrot.slane %v1788, %v1815
        %v1817 = vcombine.low %v1795, %v1802
        %v1818 = vcombine.high %v1795, %v1802
        %v1819 = vcombine.low %v1809, %v1816
        %v1820 = vcombine.high %v1809, %v1816
        %v1822 = vunpack.c.l.s4 1966171168
        %v1823 = vunpack.c.0.s8 %v1822
        %v1824 = vlaneseq
        %v1825 = vshrl.u32 %v1824, 7
        %v1826 = vsub.s32 %v1823, %v1825
        %v1827 = vrot.slane %v1817, %v1826
        %v1829 = vunpack.c.l.s4 1966171168
        %v1830 = vunpack.c.0.s8 %v1829
        %v1831 = vlaneseq
        %v1832 = vshrl.u32 %v1831, 7
        %v1833 = vsub.s32 %v1830, %v1832
        %v1834 = vrot.slane %v1818, %v1833
        %v1836 = vunpack.c.l.s4 1966171168
        %v1837 = vunpack.c.0.s8 %v1836
        %v1838 = vlaneseq
        %v1839 = vshrl.u32 %v1838, 7
        %v1840 = vsub.s32 %v1837, %v1839
        %v1841 = vrot.slane %v1819, %v1840
        %v1843 = vunpack.c.l.s4 1966171168
        %v1844 = vunpack.c.0.s8 %v1843
        %v1845 = vlaneseq
        %v1846 = vshrl.u32 %v1845, 7
        %v1847 = vsub.s32 %v1844, %v1846
        %v1848 = vrot.slane %v1820, %v1847
        %v1849 = vcombine.low %v1827, %v1841
        %v1850 = vcombine.low %v1834, %v1848
        %1853 = vrot.lane.b32.xlu0 %v1849, 32
        %v1854 = vpop.permute.xlu0 %1853
        %1855 = vrot.lane.b32.xlu0 %v1850, 32
        %v1856 = vpop.permute.xlu0 %1855
        %v1857 = vsel %vm533, %v1854, %v1856
        %v1858 = vsel %vm533, %v1856, %v1854
        %v1859 = vmul.f32 %v1858, %v540
        %v1860 = vmul.f32 %v1857, %v544
        %v1861 = vstv %s268
        %v1862 = vmul.f32 %v1859, %v1861
        %v1863 = vmul.f32 %v1860, %v1861
        %v1864 = vadd.f32 %v1755, %v1862
        %v1865 = vadd.f32 %v1756, %v1863
        %v1866 = vstv %s269
        %v1867 = vmul.f32 %v1859, %v1866
        %v1868 = vmul.f32 %v1860, %v1866
        %v1869 = vadd.f32 %v1760, %v1867
        %v1870 = vadd.f32 %v1761, %v1868
        %v1871 = vstv %s270
        %v1872 = vmul.f32 %v1859, %v1871
        %v1873 = vmul.f32 %v1860, %v1871
        %v1874 = vadd.f32 %v1765, %v1872
        %v1875 = vadd.f32 %v1766, %v1873
        %v1876 = vstv %s271
        %v1877 = vmul.f32 %v1859, %v1876
        %v1878 = vmul.f32 %v1860, %v1876
        %v1879 = vadd.f32 %v1770, %v1877
        %v1880 = vadd.f32 %v1771, %v1878
        %v1881 = vstv %s272
        %v1882 = vmul.f32 %v1859, %v1881
        %v1883 = vmul.f32 %v1860, %v1881
        %v1884 = vadd.f32 %v1775, %v1882
        %v1885 = vadd.f32 %v1776, %v1883
        %1886 = vrot.lane.b32.xlu0 %v1849, 16
        %v1887 = vpop.permute.xlu0 %1886
        %1888 = vrot.lane.b32.xlu0 %v1850, 16
        %v1889 = vpop.permute.xlu0 %1888
        %v1890 = vsel %vm568, %v1887, %v1889
        %v1891 = vsel %vm568, %v1889, %v1887
        %v1892 = vmul.f32 %v1891, %v575
        %v1893 = vmul.f32 %v1890, %v579
        %v1894 = vstv %s273
        %v1895 = vmul.f32 %v1892, %v1894
        %v1896 = vmul.f32 %v1893, %v1894
        %v1897 = vadd.f32 %v1864, %v1895
        %v1898 = vadd.f32 %v1865, %v1896
        %v1899 = vstv %s274
        %v1900 = vmul.f32 %v1892, %v1899
        %v1901 = vmul.f32 %v1893, %v1899
        %v1902 = vadd.f32 %v1869, %v1900
        %v1903 = vadd.f32 %v1870, %v1901
        %v1904 = vstv %s275
        %v1905 = vmul.f32 %v1892, %v1904
        %v1906 = vmul.f32 %v1893, %v1904
        %v1907 = vadd.f32 %v1874, %v1905
        %v1908 = vadd.f32 %v1875, %v1906
        %v1909 = vstv %s276
        %v1910 = vmul.f32 %v1892, %v1909
        %v1911 = vmul.f32 %v1893, %v1909
        %v1912 = vadd.f32 %v1879, %v1910
        %v1913 = vadd.f32 %v1880, %v1911
        %v1914 = vstv %s277
        %v1915 = vmul.f32 %v1892, %v1914
        %v1916 = vmul.f32 %v1893, %v1914
        %v1917 = vadd.f32 %v1884, %v1915
        %v1918 = vadd.f32 %v1885, %v1916
        %v1919 = vstv %s278
        %v1920 = vmul.f32 %v435, %v1919
        %v1921 = vmul.f32 %v436, %v1919
        %v1922 = vmul.f32 %v437, %v1919
        %v1923 = vmul.f32 %v438, %v1919
        %v1924 = vmul.f32 %v439, %v1919
        %v1925 = vmul.f32 %v440, %v1919
        %v1926 = vmul.f32 %v441, %v1919
        %v1927 = vmul.f32 %v442, %v1919
        %v1936 = vcombine.low %v1920, %v1921
        %v1937 = vcombine.low %v1922, %v1923
        %v1938 = vcombine.low %v1924, %v1925
        %v1939 = vcombine.low %v1926, %v1927
        %v1941 = vunpack.c.l.s4 1966171168
        %v1942 = vunpack.c.0.s8 %v1941
        %v1943 = vlaneseq
        %v1944 = vshrl.u32 %v1943, 7
        %v1945 = vsub.s32 %v1942, %v1944
        %v1946 = vrot.slane %v1936, %v1945
        %v1948 = vunpack.c.l.s4 1966171168
        %v1949 = vunpack.c.0.s8 %v1948
        %v1950 = vlaneseq
        %v1951 = vshrl.u32 %v1950, 7
        %v1952 = vsub.s32 %v1949, %v1951
        %v1953 = vrot.slane %v1937, %v1952
        %v1955 = vunpack.c.l.s4 1966171168
        %v1956 = vunpack.c.0.s8 %v1955
        %v1957 = vlaneseq
        %v1958 = vshrl.u32 %v1957, 7
        %v1959 = vsub.s32 %v1956, %v1958
        %v1960 = vrot.slane %v1938, %v1959
        %v1962 = vunpack.c.l.s4 1966171168
        %v1963 = vunpack.c.0.s8 %v1962
        %v1964 = vlaneseq
        %v1965 = vshrl.u32 %v1964, 7
        %v1966 = vsub.s32 %v1963, %v1965
        %v1967 = vrot.slane %v1939, %v1966
        %v1968 = vcombine.low %v1946, %v1953
        %v1969 = vcombine.high %v1946, %v1953
        %v1970 = vcombine.low %v1960, %v1967
        %v1971 = vcombine.high %v1960, %v1967
        %v1973 = vunpack.c.l.s4 1966171168
        %v1974 = vunpack.c.0.s8 %v1973
        %v1975 = vlaneseq
        %v1976 = vshrl.u32 %v1975, 7
        %v1977 = vsub.s32 %v1974, %v1976
        %v1978 = vrot.slane %v1968, %v1977
        %v1980 = vunpack.c.l.s4 1966171168
        %v1981 = vunpack.c.0.s8 %v1980
        %v1982 = vlaneseq
        %v1983 = vshrl.u32 %v1982, 7
        %v1984 = vsub.s32 %v1981, %v1983
        %v1985 = vrot.slane %v1969, %v1984
        %v1987 = vunpack.c.l.s4 1966171168
        %v1988 = vunpack.c.0.s8 %v1987
        %v1989 = vlaneseq
        %v1990 = vshrl.u32 %v1989, 7
        %v1991 = vsub.s32 %v1988, %v1990
        %v1992 = vrot.slane %v1970, %v1991
        %v1994 = vunpack.c.l.s4 1966171168
        %v1995 = vunpack.c.0.s8 %v1994
        %v1996 = vlaneseq
        %v1997 = vshrl.u32 %v1996, 7
        %v1998 = vsub.s32 %v1995, %v1997
        %v1999 = vrot.slane %v1971, %v1998
        %v2000 = vcombine.low %v1978, %v1992
        %v2001 = vcombine.low %v1985, %v1999
        %v2004 = vadd.f32 %v1897, %v2000
        %v2005 = vadd.f32 %v1898, %v2001
        %v2006 = vstv %s279
        %v2007 = vmul.f32 %v435, %v2006
        %v2008 = vmul.f32 %v436, %v2006
        %v2009 = vmul.f32 %v437, %v2006
        %v2010 = vmul.f32 %v438, %v2006
        %v2011 = vmul.f32 %v439, %v2006
        %v2012 = vmul.f32 %v440, %v2006
        %v2013 = vmul.f32 %v441, %v2006
        %v2014 = vmul.f32 %v442, %v2006
        %v2023 = vcombine.low %v2007, %v2008
        %v2024 = vcombine.low %v2009, %v2010
        %v2025 = vcombine.low %v2011, %v2012
        %v2026 = vcombine.low %v2013, %v2014
        %v2028 = vunpack.c.l.s4 1966171168
        %v2029 = vunpack.c.0.s8 %v2028
        %v2030 = vlaneseq
        %v2031 = vshrl.u32 %v2030, 7
        %v2032 = vsub.s32 %v2029, %v2031
        %v2033 = vrot.slane %v2023, %v2032
        %v2035 = vunpack.c.l.s4 1966171168
        %v2036 = vunpack.c.0.s8 %v2035
        %v2037 = vlaneseq
        %v2038 = vshrl.u32 %v2037, 7
        %v2039 = vsub.s32 %v2036, %v2038
        %v2040 = vrot.slane %v2024, %v2039
        %v2042 = vunpack.c.l.s4 1966171168
        %v2043 = vunpack.c.0.s8 %v2042
        %v2044 = vlaneseq
        %v2045 = vshrl.u32 %v2044, 7
        %v2046 = vsub.s32 %v2043, %v2045
        %v2047 = vrot.slane %v2025, %v2046
        %v2049 = vunpack.c.l.s4 1966171168
        %v2050 = vunpack.c.0.s8 %v2049
        %v2051 = vlaneseq
        %v2052 = vshrl.u32 %v2051, 7
        %v2053 = vsub.s32 %v2050, %v2052
        %v2054 = vrot.slane %v2026, %v2053
        %v2055 = vcombine.low %v2033, %v2040
        %v2056 = vcombine.high %v2033, %v2040
        %v2057 = vcombine.low %v2047, %v2054
        %v2058 = vcombine.high %v2047, %v2054
        %v2060 = vunpack.c.l.s4 1966171168
        %v2061 = vunpack.c.0.s8 %v2060
        %v2062 = vlaneseq
        %v2063 = vshrl.u32 %v2062, 7
        %v2064 = vsub.s32 %v2061, %v2063
        %v2065 = vrot.slane %v2055, %v2064
        %v2067 = vunpack.c.l.s4 1966171168
        %v2068 = vunpack.c.0.s8 %v2067
        %v2069 = vlaneseq
        %v2070 = vshrl.u32 %v2069, 7
        %v2071 = vsub.s32 %v2068, %v2070
        %v2072 = vrot.slane %v2056, %v2071
        %v2074 = vunpack.c.l.s4 1966171168
        %v2075 = vunpack.c.0.s8 %v2074
        %v2076 = vlaneseq
        %v2077 = vshrl.u32 %v2076, 7
        %v2078 = vsub.s32 %v2075, %v2077
        %v2079 = vrot.slane %v2057, %v2078
        %v2081 = vunpack.c.l.s4 1966171168
        %v2082 = vunpack.c.0.s8 %v2081
        %v2083 = vlaneseq
        %v2084 = vshrl.u32 %v2083, 7
        %v2085 = vsub.s32 %v2082, %v2084
        %v2086 = vrot.slane %v2058, %v2085
        %v2087 = vcombine.low %v2065, %v2079
        %v2088 = vcombine.low %v2072, %v2086
        %v2091 = vadd.f32 %v1902, %v2087
        %v2092 = vadd.f32 %v1903, %v2088
        %v2093 = vstv %s280
        %v2094 = vmul.f32 %v435, %v2093
        %v2095 = vmul.f32 %v436, %v2093
        %v2096 = vmul.f32 %v437, %v2093
        %v2097 = vmul.f32 %v438, %v2093
        %v2098 = vmul.f32 %v439, %v2093
        %v2099 = vmul.f32 %v440, %v2093
        %v2100 = vmul.f32 %v441, %v2093
        %v2101 = vmul.f32 %v442, %v2093
        %v2110 = vcombine.low %v2094, %v2095
        %v2111 = vcombine.low %v2096, %v2097
        %v2112 = vcombine.low %v2098, %v2099
        %v2113 = vcombine.low %v2100, %v2101
        %v2115 = vunpack.c.l.s4 1966171168
        %v2116 = vunpack.c.0.s8 %v2115
        %v2117 = vlaneseq
        %v2118 = vshrl.u32 %v2117, 7
        %v2119 = vsub.s32 %v2116, %v2118
        %v2120 = vrot.slane %v2110, %v2119
        %v2122 = vunpack.c.l.s4 1966171168
        %v2123 = vunpack.c.0.s8 %v2122
        %v2124 = vlaneseq
        %v2125 = vshrl.u32 %v2124, 7
        %v2126 = vsub.s32 %v2123, %v2125
        %v2127 = vrot.slane %v2111, %v2126
        %v2129 = vunpack.c.l.s4 1966171168
        %v2130 = vunpack.c.0.s8 %v2129
        %v2131 = vlaneseq
        %v2132 = vshrl.u32 %v2131, 7
        %v2133 = vsub.s32 %v2130, %v2132
        %v2134 = vrot.slane %v2112, %v2133
        %v2136 = vunpack.c.l.s4 1966171168
        %v2137 = vunpack.c.0.s8 %v2136
        %v2138 = vlaneseq
        %v2139 = vshrl.u32 %v2138, 7
        %v2140 = vsub.s32 %v2137, %v2139
        %v2141 = vrot.slane %v2113, %v2140
        %v2142 = vcombine.low %v2120, %v2127
        %v2143 = vcombine.high %v2120, %v2127
        %v2144 = vcombine.low %v2134, %v2141
        %v2145 = vcombine.high %v2134, %v2141
        %v2147 = vunpack.c.l.s4 1966171168
        %v2148 = vunpack.c.0.s8 %v2147
        %v2149 = vlaneseq
        %v2150 = vshrl.u32 %v2149, 7
        %v2151 = vsub.s32 %v2148, %v2150
        %v2152 = vrot.slane %v2142, %v2151
        %v2154 = vunpack.c.l.s4 1966171168
        %v2155 = vunpack.c.0.s8 %v2154
        %v2156 = vlaneseq
        %v2157 = vshrl.u32 %v2156, 7
        %v2158 = vsub.s32 %v2155, %v2157
        %v2159 = vrot.slane %v2143, %v2158
        %v2161 = vunpack.c.l.s4 1966171168
        %v2162 = vunpack.c.0.s8 %v2161
        %v2163 = vlaneseq
        %v2164 = vshrl.u32 %v2163, 7
        %v2165 = vsub.s32 %v2162, %v2164
        %v2166 = vrot.slane %v2144, %v2165
        %v2168 = vunpack.c.l.s4 1966171168
        %v2169 = vunpack.c.0.s8 %v2168
        %v2170 = vlaneseq
        %v2171 = vshrl.u32 %v2170, 7
        %v2172 = vsub.s32 %v2169, %v2171
        %v2173 = vrot.slane %v2145, %v2172
        %v2174 = vcombine.low %v2152, %v2166
        %v2175 = vcombine.low %v2159, %v2173
        %v2178 = vadd.f32 %v1907, %v2174
        %v2179 = vadd.f32 %v1908, %v2175
        %v2180 = vstv %s281
        %v2181 = vmul.f32 %v435, %v2180
        %v2182 = vmul.f32 %v436, %v2180
        %v2183 = vmul.f32 %v437, %v2180
        %v2184 = vmul.f32 %v438, %v2180
        %v2185 = vmul.f32 %v439, %v2180
        %v2186 = vmul.f32 %v440, %v2180
        %v2187 = vmul.f32 %v441, %v2180
        %v2188 = vmul.f32 %v442, %v2180
        %v2197 = vcombine.low %v2181, %v2182
        %v2198 = vcombine.low %v2183, %v2184
        %v2199 = vcombine.low %v2185, %v2186
        %v2200 = vcombine.low %v2187, %v2188
        %v2202 = vunpack.c.l.s4 1966171168
        %v2203 = vunpack.c.0.s8 %v2202
        %v2204 = vlaneseq
        %v2205 = vshrl.u32 %v2204, 7
        %v2206 = vsub.s32 %v2203, %v2205
        %v2207 = vrot.slane %v2197, %v2206
        %v2209 = vunpack.c.l.s4 1966171168
        %v2210 = vunpack.c.0.s8 %v2209
        %v2211 = vlaneseq
        %v2212 = vshrl.u32 %v2211, 7
        %v2213 = vsub.s32 %v2210, %v2212
        %v2214 = vrot.slane %v2198, %v2213
        %v2216 = vunpack.c.l.s4 1966171168
        %v2217 = vunpack.c.0.s8 %v2216
        %v2218 = vlaneseq
        %v2219 = vshrl.u32 %v2218, 7
        %v2220 = vsub.s32 %v2217, %v2219
        %v2221 = vrot.slane %v2199, %v2220
        %v2223 = vunpack.c.l.s4 1966171168
        %v2224 = vunpack.c.0.s8 %v2223
        %v2225 = vlaneseq
        %v2226 = vshrl.u32 %v2225, 7
        %v2227 = vsub.s32 %v2224, %v2226
        %v2228 = vrot.slane %v2200, %v2227
        %v2229 = vcombine.low %v2207, %v2214
        %v2230 = vcombine.high %v2207, %v2214
        %v2231 = vcombine.low %v2221, %v2228
        %v2232 = vcombine.high %v2221, %v2228
        %v2234 = vunpack.c.l.s4 1966171168
        %v2235 = vunpack.c.0.s8 %v2234
        %v2236 = vlaneseq
        %v2237 = vshrl.u32 %v2236, 7
        %v2238 = vsub.s32 %v2235, %v2237
        %v2239 = vrot.slane %v2229, %v2238
        %v2241 = vunpack.c.l.s4 1966171168
        %v2242 = vunpack.c.0.s8 %v2241
        %v2243 = vlaneseq
        %v2244 = vshrl.u32 %v2243, 7
        %v2245 = vsub.s32 %v2242, %v2244
        %v2246 = vrot.slane %v2230, %v2245
        %v2248 = vunpack.c.l.s4 1966171168
        %v2249 = vunpack.c.0.s8 %v2248
        %v2250 = vlaneseq
        %v2251 = vshrl.u32 %v2250, 7
        %v2252 = vsub.s32 %v2249, %v2251
        %v2253 = vrot.slane %v2231, %v2252
        %v2255 = vunpack.c.l.s4 1966171168
        %v2256 = vunpack.c.0.s8 %v2255
        %v2257 = vlaneseq
        %v2258 = vshrl.u32 %v2257, 7
        %v2259 = vsub.s32 %v2256, %v2258
        %v2260 = vrot.slane %v2232, %v2259
        %v2261 = vcombine.low %v2239, %v2253
        %v2262 = vcombine.low %v2246, %v2260
        %v2265 = vadd.f32 %v1912, %v2261
        %v2266 = vadd.f32 %v1913, %v2262
        %v2267 = vstv %s282
        %v2268 = vmul.f32 %v435, %v2267
        %v2269 = vmul.f32 %v436, %v2267
        %v2270 = vmul.f32 %v437, %v2267
        %v2271 = vmul.f32 %v438, %v2267
        %v2272 = vmul.f32 %v439, %v2267
        %v2273 = vmul.f32 %v440, %v2267
        %v2274 = vmul.f32 %v441, %v2267
        %v2275 = vmul.f32 %v442, %v2267
        %v2284 = vcombine.low %v2268, %v2269
        %v2285 = vcombine.low %v2270, %v2271
        %v2286 = vcombine.low %v2272, %v2273
        %v2287 = vcombine.low %v2274, %v2275
        %v2289 = vunpack.c.l.s4 1966171168
        %v2290 = vunpack.c.0.s8 %v2289
        %v2291 = vlaneseq
        %v2292 = vshrl.u32 %v2291, 7
        %v2293 = vsub.s32 %v2290, %v2292
        %v2294 = vrot.slane %v2284, %v2293
        %v2296 = vunpack.c.l.s4 1966171168
        %v2297 = vunpack.c.0.s8 %v2296
        %v2298 = vlaneseq
        %v2299 = vshrl.u32 %v2298, 7
        %v2300 = vsub.s32 %v2297, %v2299
        %v2301 = vrot.slane %v2285, %v2300
        %v2303 = vunpack.c.l.s4 1966171168
        %v2304 = vunpack.c.0.s8 %v2303
        %v2305 = vlaneseq
        %v2306 = vshrl.u32 %v2305, 7
        %v2307 = vsub.s32 %v2304, %v2306
        %v2308 = vrot.slane %v2286, %v2307
        %v2310 = vunpack.c.l.s4 1966171168
        %v2311 = vunpack.c.0.s8 %v2310
        %v2312 = vlaneseq
        %v2313 = vshrl.u32 %v2312, 7
        %v2314 = vsub.s32 %v2311, %v2313
        %v2315 = vrot.slane %v2287, %v2314
        %v2316 = vcombine.low %v2294, %v2301
        %v2317 = vcombine.high %v2294, %v2301
        %v2318 = vcombine.low %v2308, %v2315
        %v2319 = vcombine.high %v2308, %v2315
        %v2321 = vunpack.c.l.s4 1966171168
        %v2322 = vunpack.c.0.s8 %v2321
        %v2323 = vlaneseq
        %v2324 = vshrl.u32 %v2323, 7
        %v2325 = vsub.s32 %v2322, %v2324
        %v2326 = vrot.slane %v2316, %v2325
        %v2328 = vunpack.c.l.s4 1966171168
        %v2329 = vunpack.c.0.s8 %v2328
        %v2330 = vlaneseq
        %v2331 = vshrl.u32 %v2330, 7
        %v2332 = vsub.s32 %v2329, %v2331
        %v2333 = vrot.slane %v2317, %v2332
        %v2335 = vunpack.c.l.s4 1966171168
        %v2336 = vunpack.c.0.s8 %v2335
        %v2337 = vlaneseq
        %v2338 = vshrl.u32 %v2337, 7
        %v2339 = vsub.s32 %v2336, %v2338
        %v2340 = vrot.slane %v2318, %v2339
        %v2342 = vunpack.c.l.s4 1966171168
        %v2343 = vunpack.c.0.s8 %v2342
        %v2344 = vlaneseq
        %v2345 = vshrl.u32 %v2344, 7
        %v2346 = vsub.s32 %v2343, %v2345
        %v2347 = vrot.slane %v2319, %v2346
        %v2348 = vcombine.low %v2326, %v2340
        %v2349 = vcombine.low %v2333, %v2347
        %v2352 = vadd.f32 %v1917, %v2348
        %v2353 = vadd.f32 %v1918, %v2349
        %2354 = vrot.lane.b32.xlu0 %v1849, 112
        %v2355 = vpop.permute.xlu0 %2354
        %2356 = vrot.lane.b32.xlu0 %v1850, 112
        %v2357 = vpop.permute.xlu0 %2356
        %v2358 = vsel %vm1048, %v2355, %v2357
        %v2359 = vsel %vm1048, %v2357, %v2355
        %v2360 = vmul.f32 %v2358, %v1055
        %v2361 = vmul.f32 %v2359, %v1059
        %v2362 = vstv %s283
        %v2363 = vmul.f32 %v2360, %v2362
        %v2364 = vmul.f32 %v2361, %v2362
        %v2365 = vadd.f32 %v2004, %v2363
        %v2366 = vadd.f32 %v2005, %v2364
        %v2367 = vstv %s284
        %v2368 = vmul.f32 %v2360, %v2367
        %v2369 = vmul.f32 %v2361, %v2367
        %v2370 = vadd.f32 %v2091, %v2368
        %v2371 = vadd.f32 %v2092, %v2369
        %v2372 = vstv %s285
        %v2373 = vmul.f32 %v2360, %v2372
        %v2374 = vmul.f32 %v2361, %v2372
        %v2375 = vadd.f32 %v2178, %v2373
        %v2376 = vadd.f32 %v2179, %v2374
        %v2377 = vstv %s286
        %v2378 = vmul.f32 %v2360, %v2377
        %v2379 = vmul.f32 %v2361, %v2377
        %v2380 = vadd.f32 %v2265, %v2378
        %v2381 = vadd.f32 %v2266, %v2379
        %v2382 = vstv %s287
        %v2383 = vmul.f32 %v2360, %v2382
        %v2384 = vmul.f32 %v2361, %v2382
        %v2385 = vadd.f32 %v2352, %v2383
        %v2386 = vadd.f32 %v2353, %v2384
        %2387 = vrot.lane.b32.xlu0 %v1849, 96
        %v2388 = vpop.permute.xlu0 %2387
        %2389 = vrot.lane.b32.xlu0 %v1850, 96
        %v2390 = vpop.permute.xlu0 %2389
        %v2391 = vsel %vm1093, %v2388, %v2390
        %v2392 = vsel %vm1093, %v2390, %v2388
        %v2393 = vmul.f32 %v2391, %v1100
        %v2394 = vmul.f32 %v2392, %v1104
        %v2395 = vstv %s288
        %v2396 = vmul.f32 %v2393, %v2395
        %v2397 = vmul.f32 %v2394, %v2395
        %v2398 = vadd.f32 %v2365, %v2396
        %v2399 = vadd.f32 %v2366, %v2397
        %v2400 = vstv %s289
        %v2401 = vmul.f32 %v2393, %v2400
        %v2402 = vmul.f32 %v2394, %v2400
        %v2403 = vadd.f32 %v2370, %v2401
        %v2404 = vadd.f32 %v2371, %v2402
        %v2405 = vstv %s290
        %v2406 = vmul.f32 %v2393, %v2405
        %v2407 = vmul.f32 %v2394, %v2405
        %v2408 = vadd.f32 %v2375, %v2406
        %v2409 = vadd.f32 %v2376, %v2407
        %v2410 = vstv %s291
        %v2411 = vmul.f32 %v2393, %v2410
        %v2412 = vmul.f32 %v2394, %v2410
        %v2413 = vadd.f32 %v2380, %v2411
        %v2414 = vadd.f32 %v2381, %v2412
        %v2415 = vstv %s292
        %v2416 = vmul.f32 %v2393, %v2415
        %v2417 = vmul.f32 %v2394, %v2415
        %v2418 = vadd.f32 %v2385, %v2416
        %v2419 = vadd.f32 %v2386, %v2417
        %2420 = vrot.lane.b32.xlu0 %v2398, 2
        %v2421 = vpop.permute.xlu0 %2420
        %2422 = vrot.lane.b32.xlu0 %v2399, 2
        %v2423 = vpop.permute.xlu0 %2422
        %vm2424 = vcmp.lt.s32.totalorder %v532, 2
        %v2425 = vsel %vm2424, %v2421, %v2423
        %v2426 = vsel %vm2424, %v2423, %v2421
        %v2428 = vlaneseq
        %v2429 = vshrl.u32 %v2428, 7
        %v2430 = vsub.s32 0, %v2429
        %v2431 = vrot.slane %v295, %v2430
        %v2432 = vlaneseq
        %v2433 = vshrl.u32 %v2432, 7
        %v2434 = vsub.s32 1, %v2433
        %v2435 = vrot.slane %v295, %v2434
        %v2438 = vmul.f32 %v2426, %v2431
        %v2439 = vmul.f32 %v2425, %v2435
        %2440 = vrot.lane.b32.xlu0 %v2403, 1
        %v2441 = vpop.permute.xlu0 %2440
        %2442 = vrot.lane.b32.xlu0 %v2404, 1
        %v2443 = vpop.permute.xlu0 %2442
        %vm2444 = vcmp.lt.s32.totalorder %v532, 1
        %v2445 = vsel %vm2444, %v2441, %v2443
        %v2446 = vsel %vm2444, %v2443, %v2441
        %v2448 = vlaneseq
        %v2449 = vshrl.u32 %v2448, 7
        %v2450 = vsub.s32 0, %v2449
        %v2451 = vrot.slane %v299, %v2450
        %v2452 = vlaneseq
        %v2453 = vshrl.u32 %v2452, 7
        %v2454 = vsub.s32 1, %v2453
        %v2455 = vrot.slane %v299, %v2454
        %v2458 = vmul.f32 %v2446, %v2451
        %v2459 = vmul.f32 %v2445, %v2455
        %v2460 = vadd.f32 %v2438, %v2458
        %v2461 = vadd.f32 %v2439, %v2459
        %v2462 = vadd.f32 %v2460, %v2408
        %v2463 = vadd.f32 %v2461, %v2409
        %2464 = vrot.lane.b32.xlu0 %v2413, 127
        %v2465 = vpop.permute.xlu0 %2464
        %2466 = vrot.lane.b32.xlu0 %v2414, 127
        %v2467 = vpop.permute.xlu0 %2466
        %vm2468 = vcmp.lt.s32.totalorder %v532, 127
        %v2469 = vsel %vm2468, %v2465, %v2467
        %v2470 = vsel %vm2468, %v2467, %v2465
        %v2472 = vlaneseq
        %v2473 = vshrl.u32 %v2472, 7
        %v2474 = vsub.s32 0, %v2473
        %v2475 = vrot.slane %v303, %v2474
        %v2476 = vlaneseq
        %v2477 = vshrl.u32 %v2476, 7
        %v2478 = vsub.s32 1, %v2477
        %v2479 = vrot.slane %v303, %v2478
        %v2482 = vmul.f32 %v2469, %v2475
        %v2483 = vmul.f32 %v2470, %v2479
        %v2484 = vadd.f32 %v2462, %v2482
        %v2485 = vadd.f32 %v2463, %v2483
        %2486 = vrot.lane.b32.xlu0 %v2418, 126
        %v2487 = vpop.permute.xlu0 %2486
        %2488 = vrot.lane.b32.xlu0 %v2419, 126
        %v2489 = vpop.permute.xlu0 %2488
        %vm2490 = vcmp.lt.s32.totalorder %v532, 126
        %v2491 = vsel %vm2490, %v2487, %v2489
        %v2492 = vsel %vm2490, %v2489, %v2487
        %v2494 = vlaneseq
        %v2495 = vshrl.u32 %v2494, 7
        %v2496 = vsub.s32 0, %v2495
        %v2497 = vrot.slane %v307, %v2496
        %v2498 = vlaneseq
        %v2499 = vshrl.u32 %v2498, 7
        %v2500 = vsub.s32 1, %v2499
        %v2501 = vrot.slane %v307, %v2500
        %v2504 = vmul.f32 %v2491, %v2497
        %v2505 = vmul.f32 %v2492, %v2501
        %v2506 = vadd.f32 %v2484, %v2504
        %v2507 = vadd.f32 %v2485, %v2505
        %v2508 = vxor.u32 %v2506, 2147483648
        %v2509 = vxor.u32 %v2507, 2147483648
        %v2510 = vmul.f32 %v2508, 1.442695
        %v2511 = vpow.pop %v2510
        %v2512 = vmul.f32 %v2509, 1.442695
        %v2513 = vpow.pop %v2512
        %v2514 = vadd.f32 %v2511, 1.0
        %v2515 = vadd.f32 %v2513, 1.0
        %v2516 = vrcp.pop %v2514
        %v2517 = vmul.f32 1.0, %v2516
        %v2518 = vrcp.pop %v2515
        %v2519 = vmul.f32 1.0, %v2518
        %2520 = vst [vmem:[%s216] sm:$0xff] %v2517
        %2521 = vst [vmem:[%s216 + $0x8] sm:$0xff] %v2519
        %s2522 = sand.u32 %s98, 1
        %s2523 = scalar_lea.sflag [#allocation4], %s2522
        %s2524 = sand.u32 %s98, 1
        %s2525 = smul.addr %s2524, 16
        %s2526 = scalar_lea.vmem [#allocation9], %s2525
        // Predicated region
        $region45: #{tpu_custom_call.1} parent=31 // pred_check
          %p2527 = pneg %p108
        $region46: #{tpu_custom_call.1} parent=31 // pred_check_branch
          %2529 = sbr.rel (%p2527) target = $region48
        $region47: #{tpu_custom_call.1} parent=31 // pred_region
          %s2531 = ssub.s32 256, 256
          %2532 = vsyncadd %s2523, %s2531
          %s2533 = smul.addr %s22, 2
          %s2534 = smul.addr %s2533, 128
          %s2535 = scalar_lea.hbm %s3, %s2534
          %s2537 = sshll.u32 %s2526, 4
          %s2538 = int_to_ptr.vmem [resolvable:$true] %s2537
          %2540 = dma.vmem_to_hbm [thread:$0]  %s2538, 256, %s2535, %s2523
        $region48: #{tpu_custom_call.1} parent=31 // pred_fallthru
          _
      $region32: #{tpu_custom_call.1} parent=5 // pred_fallthru
        _
      %p2541 = scmp.le.s32.totalorder 2, %s17
      // Predicated region
      $region49: #{tpu_custom_call.1} parent=5 // pred_check
        %p2542 = pneg %p2541
      $region50: #{tpu_custom_call.1} parent=5 // pred_check_branch
        %2544 = sbr.rel (%p2542) target = $region52
      $region51: #{tpu_custom_call.1} parent=5 // pred_region
        %s2545 = ssub.s32 %s17, 2
        // Predicated region
        $region53: #{tpu_custom_call.1} parent=51 // pred_check
          %p2546 = pneg %p114
        $region54: #{tpu_custom_call.1} parent=51 // pred_check_branch
          %2548 = sbr.rel (%p2546) target = $region56
        $region55: #{tpu_custom_call.1} parent=51 // pred_region
          %s2549 = sand.u32 %s99, 1
          %s2550 = scalar_lea.sflag [#allocation4], %s2549
          %s2551 = sand.u32 %s99, 1
          %s2552 = smul.addr %s2551, 16
          %s2553 = scalar_lea.vmem [#allocation9], %s2552
          %2554 = dma.done %s2550, 256
        $region56: #{tpu_custom_call.1} parent=51 // pred_fallthru
          _
      $region52: #{tpu_custom_call.1} parent=5 // pred_fallthru
        _
    $region6: #{tpu_custom_call.1} parent=1 // loop_footer
      %s21 = sadd.s32 1, %s17
    $region7: #{tpu_custom_call.1} parent=1 // loop_footer_branch
      %16 = sbr.rel target = $region3
    $region8: #{tpu_custom_call.1} parent=1 // loop_exit
      _
    %2555 = vsyncpa [#allocation3], 1
    %s2556 = scalar_lea.sflag [#allocation3], 1
    %2557 = vsyncpa %s2556, 1
    %2558 = vsyncpa [#allocation8], 1
    %s2559 = scalar_lea.sflag [#allocation8], 1
    %2560 = vsyncpa %s2559, 1
    %2561 = vsyncpa [#allocation4], 1
    %s2562 = scalar_lea.sflag [#allocation4], 1
    %2563 = vsyncpa %s2562, 1
    %2564 = vsyncpa [#allocation5], 1
    %s2565 = scalar_lea.sflag [#allocation5], 1
    %2566 = vsyncpa %s2565, 1

</llo_original>
